<compile_context>
chip_gen: v7x
topology: tpu7x:2x2x1
jax: 0.10.0
libtpu: 0.0.40
codegen_flags: <defaults>
</compile_context>

<pallas_src>
import functools

import jax
import jax.numpy as jnp
from jax import lax
from jax.experimental import pallas as pl
from jax.experimental.pallas import tpu as pltpu


def _lstm_mlp_kernel(x_ref,                        # (T, Bb, D)   time-major input block
                     wih0t_ref, whh0t_ref, b0_ref,  # (D,4H), (H,4H), (1,4H)
                     w1t_ref, b1_ref,               # (2H,4H) = [W_ih1.T; W_hh1.T], (1,4H)
                     wfc1t_ref, bfc1_ref,           # (H,64), (1,64)
                     wfc2t_ref, bfc2_ref,           # (64,Cpad), (1,Cpad)
                     out_ref,                       # (Bb, Cpad)
                     gx0_ref,                       # scratch (T, Bb, 4H)
                     *, num_classes):
    T, Bb, D = x_ref.shape
    H = whh0t_ref.shape[0]

    # ---- hoisted layer-0 input projection (one big MXU matmul, bias folded in) ----
    x_all = x_ref[...].reshape(T * Bb, D)
    gx0 = jnp.dot(x_all, wih0t_ref[...], preferred_element_type=jnp.float32) + b0_ref[...]
    gx0_ref[...] = gx0.reshape(T, Bb, 4 * H)

    whh0t = whh0t_ref[...]
    w1t = w1t_ref[...]
    b1 = b1_ref[...]

    def gates_to_hc(gates, c):
        # One full-width sigmoid on (Bb, 4H), then tanh only on the g slice.
        sig = jax.nn.sigmoid(gates)
        i = sig[:, 0 * H:1 * H]
        f = sig[:, 1 * H:2 * H]
        o = sig[:, 3 * H:4 * H]
        g = jnp.tanh(gates[:, 2 * H:3 * H])
        c_new = f * c + i * g
        h_new = o * jnp.tanh(c_new)
        return h_new, c_new

    def body(t, carry):
        h1, c1, h2, c2 = carry
        # layer 0: input part precomputed; only the hidden matmul per step
        g0 = gx0_ref[t] + jnp.dot(h1, whh0t, preferred_element_type=jnp.float32)
        h1, c1 = gates_to_hc(g0, c1)
        # layer 1: fused input+hidden matmul on concatenated [h1, h2]
        g1 = jnp.dot(jnp.concatenate([h1, h2], axis=1), w1t,
                     preferred_element_type=jnp.float32) + b1
        h2, c2 = gates_to_hc(g1, c2)
        return (h1, c1, h2, c2)

    zeros = jnp.zeros((Bb, H), jnp.float32)
    _, _, h2, _ = lax.fori_loop(0, T, body, (zeros, zeros, zeros, zeros), unroll=True)

    # fc1 -> relu
    z = jnp.maximum(
        jnp.dot(h2, wfc1t_ref[...], preferred_element_type=jnp.float32) + bfc1_ref[...],
        0.0)
    # TODO(synk): Dropout(p=0.3) is identity in eval mode; training-mode dropout not implemented.
    logits = jnp.dot(z, wfc2t_ref[...], preferred_element_type=jnp.float32) + bfc2_ref[...]

    # softmax over classes; padded class lanes masked to -inf so they contribute 0
    col = lax.broadcasted_iota(jnp.int32, logits.shape, 1)
    logits = jnp.where(col < num_classes, logits, -jnp.inf)
    logits = logits - jnp.max(logits, axis=1, keepdims=True)
    e = jnp.exp(logits)
    out_ref[...] = e * pl.reciprocal(jnp.sum(e, axis=1, keepdims=True), approx=True)


@jax.jit
def lstm_forward(x, params):
    """x: (B, T, D) float32, batch_first like PyTorch. Returns (B, num_classes)."""
    B, T, D = x.shape
    H = params["w_hh_l0"].shape[1]
    C = params["w_fc2"].shape[0]
    C_pad = ((C + 127) // 128) * 128

    # Pad batch to a sublane-aligned block; block the batch over a parallel grid axis.
    b_align = ((B + 7) // 8) * 8
    block_b = min(128, b_align)
    B_pad = ((B + block_b - 1) // block_b) * block_b

    x_tm = jnp.transpose(x, (1, 0, 2))                      # (T, B, D) time-major
    if B_pad != B:
        x_tm = jnp.pad(x_tm, ((0, 0), (0, B_pad - B), (0, 0)))

    # Pre-transpose / fuse / pad weights outside the kernel (cheap one-time XLA ops).
    wih0t = params["w_ih_l0"].T                             # (D, 4H)
    whh0t = params["w_hh_l0"].T                             # (H, 4H)
    b0 = params["b_l0"]                                     # (1, 4H)
    w1t = jnp.concatenate([params["w_ih_l1"].T, params["w_hh_l1"].T], axis=0)  # (2H, 4H)
    b1 = params["b_l1"]                                     # (1, 4H)
    wfc1t = params["w_fc1"].T                               # (H, 64)
    bfc1 = params["b_fc1"]                                  # (1, 64)
    wfc2t = jnp.pad(params["w_fc2"].T, ((0, 0), (0, C_pad - C)))   # (64, C_pad)
    bfc2 = jnp.pad(params["b_fc2"], ((0, 0), (0, C_pad - C)))      # (1, C_pad)

    def resident(a):
        # full-array block, constant index map -> stays resident across grid steps
        return pl.BlockSpec(a.shape, lambda i, _nd=a.ndim: (0,) * _nd)

    kernel = functools.partial(_lstm_mlp_kernel, num_classes=C)

    out = pl.pallas_call(
        kernel,
        out_shape=jax.ShapeDtypeStruct((B_pad, C_pad), jnp.float32),
        grid=(B_pad // block_b,),
        in_specs=[
            pl.BlockSpec((T, block_b, D), lambda i: (0, i, 0)),
            resident(wih0t), resident(whh0t), resident(b0),
            resident(w1t), resident(b1),
            resident(wfc1t), resident(bfc1),
            resident(wfc2t), resident(bfc2),
        ],
        out_specs=pl.BlockSpec((block_b, C_pad), lambda i: (i, 0)),
        scratch_shapes=[pltpu.VMEM((T, block_b, 4 * H), jnp.float32)],
        compiler_params=pltpu.CompilerParams(
            dimension_semantics=("parallel",)),
    )(x_tm, wih0t, whh0t, b0, w1t, b1, wfc1t, bfc1, wfc2t, bfc2)

    return out[:B, :C]


def init_params(key, input_size, hidden_size, num_classes):
    H = hidden_size
    ks = jax.random.split(key, 12)
    k_lstm = 1.0 / jnp.sqrt(H)

    def u(k, shape, bound):
        return jax.random.uniform(k, shape, jnp.float32, -bound, bound)

    params = {
        "w_ih_l0": u(ks[0], (4 * H, input_size), k_lstm),
        "w_hh_l0": u(ks[1], (4 * H, H), k_lstm),
        "b_l0": (u(ks[2], (1, 4 * H), k_lstm) + u(ks[3], (1, 4 * H), k_lstm)),
        "w_ih_l1": u(ks[4], (4 * H, H), k_lstm),
        "w_hh_l1": u(ks[5], (4 * H, H), k_lstm),
        "b_l1": (u(ks[6], (1, 4 * H), k_lstm) + u(ks[7], (1, 4 * H), k_lstm)),
        "w_fc1": u(ks[8], (64, H), 1.0 / jnp.sqrt(H)),
        "b_fc1": u(ks[9], (1, 64), 1.0 / jnp.sqrt(H)),
        "w_fc2": u(ks[10], (num_classes, 64), 1.0 / jnp.sqrt(64.0)),
        "b_fc2": u(ks[11], (1, num_classes), 1.0 / jnp.sqrt(64.0)),
    }
    return params


def reference_forward(x, params):
    """Pure-JAX reference mirroring the PyTorch forward (eval mode)."""
    B, T, D = x.shape
    H = params["w_hh_l0"].shape[1]

    def cell(x_t, h, c, wih, whh, b):
        gates = x_t @ wih.T + h @ whh.T + b
        i = jax.nn.sigmoid(gates[:, 0 * H:1 * H])
        f = jax.nn.sigmoid(gates[:, 1 * H:2 * H])
        g = jnp.tanh(gates[:, 2 * H:3 * H])
        o = jax.nn.sigmoid(gates[:, 3 * H:4 * H])
        c = f * c + i * g
        h = o * jnp.tanh(c)
        return h, c

    def step(carry, x_t):
        h1, c1, h2, c2 = carry
        h1, c1 = cell(x_t, h1, c1, params["w_ih_l0"], params["w_hh_l0"], params["b_l0"])
        h2, c2 = cell(h1, h2, c2, params["w_ih_l1"], params["w_hh_l1"], params["b_l1"])
        return (h1, c1, h2, c2), None

    zeros = jnp.zeros((B, H), jnp.float32)
    (h1, c1, h2, c2), _ = lax.scan(step, (zeros, zeros, zeros, zeros),
                                   jnp.transpose(x, (1, 0, 2)))
    z = jnp.maximum(h2 @ params["w_fc1"].T + params["b_fc1"], 0.0)
    logits = z @ params["w_fc2"].T + params["b_fc2"]
    return jax.nn.softmax(logits, axis=1)


if __name__ == "__main__":
    B, T, D = 2, 8, 16
    hidden_size = 32
    num_classes = 10

    key = jax.random.PRNGKey(0)
    kx, kp = jax.random.split(key)
    x = jax.random.normal(kx, (B, T, D), jnp.float32)
    params = init_params(kp, D, hidden_size, num_classes)

    out = jax.block_until_ready(lstm_forward(x, params))
    ref = reference_forward(x, params)

    assert out.shape == (B, num_classes)
    # tolerance accounts for the approximate EUP reciprocal in the softmax denominator
    err = float(jnp.max(jnp.abs(out - ref)))
    assert jnp.allclose(out, ref, atol=2e-3, rtol=2e-3), f"mismatch: max abs err {err}"
    print("KERNEL_OK")
</pallas_src>

<mosaic_0001>
module attributes {stable_mosaic.version = 11 : i64} {
  func.func @_lstm_mlp_kernel(%arg0: i32, %arg1: memref<8x8x16xf32, #tpu.memory_space<vmem>>, %arg2: memref<16x128xf32, #tpu.memory_space<vmem>>, %arg3: memref<32x128xf32, #tpu.memory_space<vmem>>, %arg4: memref<1x128xf32, #tpu.memory_space<vmem>>, %arg5: memref<64x128xf32, #tpu.memory_space<vmem>>, %arg6: memref<1x128xf32, #tpu.memory_space<vmem>>, %arg7: memref<32x64xf32, #tpu.memory_space<vmem>>, %arg8: memref<1x64xf32, #tpu.memory_space<vmem>>, %arg9: memref<64x128xf32, #tpu.memory_space<vmem>>, %arg10: memref<1x128xf32, #tpu.memory_space<vmem>>, %arg11: memref<8x128xf32, #tpu.memory_space<vmem>>, %arg12: memref<8x8x128xf32, #tpu.memory_space<vmem>>) attributes {dimension_semantics = [#tpu.dimension_semantics<parallel>], iteration_bounds = array<i64: 1>, scalar_prefetch = 0 : i64, scratch_operands = 1 : i64, tpu.core_type = #tpu.core_type<tc>, window_params = [{transform_indices = @transform_0, window_bounds = array<i64: 8, 8, 16>}, {pipeline_mode = #tpu.pipeline_mode<synchronous>, transform_indices = @transform_1, window_bounds = array<i64: 16, 128>}, {pipeline_mode = #tpu.pipeline_mode<synchronous>, transform_indices = @transform_2, window_bounds = array<i64: 32, 128>}, {pipeline_mode = #tpu.pipeline_mode<synchronous>, transform_indices = @transform_3, window_bounds = array<i64: 1, 128>}, {pipeline_mode = #tpu.pipeline_mode<synchronous>, transform_indices = @transform_4, window_bounds = array<i64: 64, 128>}, {pipeline_mode = #tpu.pipeline_mode<synchronous>, transform_indices = @transform_5, window_bounds = array<i64: 1, 128>}, {pipeline_mode = #tpu.pipeline_mode<synchronous>, transform_indices = @transform_6, window_bounds = array<i64: 32, 64>}, {pipeline_mode = #tpu.pipeline_mode<synchronous>, transform_indices = @transform_7, window_bounds = array<i64: 1, 64>}, {pipeline_mode = #tpu.pipeline_mode<synchronous>, transform_indices = @transform_8, window_bounds = array<i64: 64, 128>}, {pipeline_mode = #tpu.pipeline_mode<synchronous>, transform_indices = @transform_9, window_bounds = array<i64: 1, 128>}, {transform_indices = @transform_10, window_bounds = array<i64: 8, 128>}]} {
    %c0 = arith.constant 0 : index
    %c0_0 = arith.constant 0 : index
    %c0_1 = arith.constant 0 : index
    %0 = vector.load %arg1[%c0, %c0_0, %c0_1] : memref<8x8x16xf32, #tpu.memory_space<vmem>>, vector<8x8x16xf32>
    %1 = vector.shape_cast %0 : vector<8x8x16xf32> to vector<64x16xf32>
    %c0_2 = arith.constant 0 : index
    %c0_3 = arith.constant 0 : index
    %2 = vector.load %arg2[%c0_2, %c0_3] : memref<16x128xf32, #tpu.memory_space<vmem>>, vector<16x128xf32>
    %cst = arith.constant dense<0.000000e+00> : vector<64x128xf32>
    %3 = tpu.matmul %1, %2, %cst {dimension_numbers = #tpu.dot_dimension_numbers<[1], [0], [0], [1], [0, 0, 1, 1], [], []>} : vector<64x16xf32>, vector<16x128xf32>, vector<64x128xf32> -> vector<64x128xf32>
    %c0_4 = arith.constant 0 : index
    %c0_5 = arith.constant 0 : index
    %4 = vector.load %arg4[%c0_4, %c0_5] : memref<1x128xf32, #tpu.memory_space<vmem>>, vector<1x128xf32>
    %5 = vector.broadcast %4 : vector<1x128xf32> to vector<64x128xf32>
    %6 = arith.addf %3, %5 : vector<64x128xf32>
    %7 = vector.shape_cast %6 : vector<64x128xf32> to vector<8x8x128xf32>
    %c0_6 = arith.constant 0 : index
    %c0_7 = arith.constant 0 : index
    %c0_8 = arith.constant 0 : index
    %8 = vector.load %arg12[%c0_6, %c0_7, %c0_8] : memref<8x8x128xf32, #tpu.memory_space<vmem>>, vector<8x8x128xf32>
    tpu.vector_store %arg12[%c0_6, %c0_7, %c0_8], %7 {strides = array<i32>} : memref<8x8x128xf32, #tpu.memory_space<vmem>>, vector<8x8x128xf32>,
    %c0_9 = arith.constant 0 : index
    %c0_10 = arith.constant 0 : index
    %9 = vector.load %arg3[%c0_9, %c0_10] : memref<32x128xf32, #tpu.memory_space<vmem>>, vector<32x128xf32>
    %c0_11 = arith.constant 0 : index
    %c0_12 = arith.constant 0 : index
    %10 = vector.load %arg5[%c0_11, %c0_12] : memref<64x128xf32, #tpu.memory_space<vmem>>, vector<64x128xf32>
    %c0_13 = arith.constant 0 : index
    %c0_14 = arith.constant 0 : index
    %11 = vector.load %arg6[%c0_13, %c0_14] : memref<1x128xf32, #tpu.memory_space<vmem>>, vector<1x128xf32>
    %cst_15 = arith.constant 0.000000e+00 : f32
    %12 = vector.broadcast %cst_15 : f32 to vector<8x32xf32>
    %c0_i32 = arith.constant 0 : i32
    %13 = arith.index_cast %c0_i32 : i32 to index
    %c0_16 = arith.constant 0 : index
    %c0_17 = arith.constant 0 : index
    %14 = vector.load %arg12[%13, %c0_16, %c0_17] : memref<8x8x128xf32, #tpu.memory_space<vmem>>, vector<1x8x128xf32>
    %15 = vector.shape_cast %14 : vector<1x8x128xf32> to vector<8x128xf32>
    %cst_18 = arith.constant dense<0.000000e+00> : vector<8x128xf32>
    %16 = tpu.matmul %12, %9, %cst_18 {dimension_numbers = #tpu.dot_dimension_numbers<[1], [0], [0], [1], [0, 0, 1, 1], [], []>} : vector<8x32xf32>, vector<32x128xf32>, vector<8x128xf32> -> vector<8x128xf32>
    %17 = arith.addf %15, %16 : vector<8x128xf32>
    %18 = arith.negf %17 : vector<8x128xf32>
    %19 = math.exp %18 : vector<8x128xf32>
    %cst_19 = arith.constant 1.000000e+00 : f32
    %20 = vector.broadcast %cst_19 : f32 to vector<8x128xf32>
    %21 = arith.addf %20, %19 : vector<8x128xf32>
    %22 = arith.divf %20, %21 : vector<8x128xf32>
    %23 = vector.extract_strided_slice %22 {offsets = [0, 0], sizes = [8, 32], strides = [1, 1]} : vector<8x128xf32> to vector<8x32xf32>
    %24 = vector.extract_strided_slice %22 {offsets = [0, 32], sizes = [8, 32], strides = [1, 1]} : vector<8x128xf32> to vector<8x32xf32>
    %25 = vector.extract_strided_slice %22 {offsets = [0, 96], sizes = [8, 32], strides = [1, 1]} : vector<8x128xf32> to vector<8x32xf32>
    %26 = vector.extract_strided_slice %17 {offsets = [0, 64], sizes = [8, 32], strides = [1, 1]} : vector<8x128xf32> to vector<8x32xf32>
    %27 = math.tanh %26 : vector<8x32xf32>
    %28 = arith.mulf %24, %12 : vector<8x32xf32>
    %29 = arith.mulf %23, %27 : vector<8x32xf32>
    %30 = arith.addf %28, %29 : vector<8x32xf32>
    %31 = math.tanh %30 : vector<8x32xf32>
    %32 = arith.mulf %25, %31 : vector<8x32xf32>
    %33 = tpu.concatenate %32, %12 in 1 : vector<8x32xf32>, vector<8x32xf32> -> vector<8x64xf32>
    %cst_20 = arith.constant dense<0.000000e+00> : vector<8x128xf32>
    %34 = tpu.matmul %33, %10, %cst_20 {dimension_numbers = #tpu.dot_dimension_numbers<[1], [0], [0], [1], [0, 0, 1, 1], [], []>} : vector<8x64xf32>, vector<64x128xf32>, vector<8x128xf32> -> vector<8x128xf32>
    %35 = vector.broadcast %11 : vector<1x128xf32> to vector<8x128xf32>
    %36 = arith.addf %34, %35 : vector<8x128xf32>
    %37 = arith.negf %36 : vector<8x128xf32>
    %38 = math.exp %37 : vector<8x128xf32>
    %cst_21 = arith.constant 1.000000e+00 : f32
    %39 = vector.broadcast %cst_21 : f32 to vector<8x128xf32>
    %40 = arith.addf %39, %38 : vector<8x128xf32>
    %41 = arith.divf %39, %40 : vector<8x128xf32>
    %42 = vector.extract_strided_slice %41 {offsets = [0, 0], sizes = [8, 32], strides = [1, 1]} : vector<8x128xf32> to vector<8x32xf32>
    %43 = vector.extract_strided_slice %41 {offsets = [0, 32], sizes = [8, 32], strides = [1, 1]} : vector<8x128xf32> to vector<8x32xf32>
    %44 = vector.extract_strided_slice %41 {offsets = [0, 96], sizes = [8, 32], strides = [1, 1]} : vector<8x128xf32> to vector<8x32xf32>
    %45 = vector.extract_strided_slice %36 {offsets = [0, 64], sizes = [8, 32], strides = [1, 1]} : vector<8x128xf32> to vector<8x32xf32>
    %46 = math.tanh %45 : vector<8x32xf32>
    %47 = arith.mulf %43, %12 : vector<8x32xf32>
    %48 = arith.mulf %42, %46 : vector<8x32xf32>
    %49 = arith.addf %47, %48 : vector<8x32xf32>
    %50 = math.tanh %49 : vector<8x32xf32>
    %51 = arith.mulf %44, %50 : vector<8x32xf32>
    %c1_i32 = arith.constant 1 : i32
    %52 = arith.index_cast %c1_i32 : i32 to index
    %c0_22 = arith.constant 0 : index
    %c0_23 = arith.constant 0 : index
    %53 = vector.load %arg12[%52, %c0_22, %c0_23] : memref<8x8x128xf32, #tpu.memory_space<vmem>>, vector<1x8x128xf32>
    %54 = vector.shape_cast %53 : vector<1x8x128xf32> to vector<8x128xf32>
    %cst_24 = arith.constant dense<0.000000e+00> : vector<8x128xf32>
    %55 = tpu.matmul %32, %9, %cst_24 {dimension_numbers = #tpu.dot_dimension_numbers<[1], [0], [0], [1], [0, 0, 1, 1], [], []>} : vector<8x32xf32>, vector<32x128xf32>, vector<8x128xf32> -> vector<8x128xf32>
    %56 = arith.addf %54, %55 : vector<8x128xf32>
    %57 = arith.negf %56 : vector<8x128xf32>
    %58 = math.exp %57 : vector<8x128xf32>
    %cst_25 = arith.constant 1.000000e+00 : f32
    %59 = vector.broadcast %cst_25 : f32 to vector<8x128xf32>
    %60 = arith.addf %59, %58 : vector<8x128xf32>
    %61 = arith.divf %59, %60 : vector<8x128xf32>
    %62 = vector.extract_strided_slice %61 {offsets = [0, 0], sizes = [8, 32], strides = [1, 1]} : vector<8x128xf32> to vector<8x32xf32>
    %63 = vector.extract_strided_slice %61 {offsets = [0, 32], sizes = [8, 32], strides = [1, 1]} : vector<8x128xf32> to vector<8x32xf32>
    %64 = vector.extract_strided_slice %61 {offsets = [0, 96], sizes = [8, 32], strides = [1, 1]} : vector<8x128xf32> to vector<8x32xf32>
    %65 = vector.extract_strided_slice %56 {offsets = [0, 64], sizes = [8, 32], strides = [1, 1]} : vector<8x128xf32> to vector<8x32xf32>
    %66 = math.tanh %65 : vector<8x32xf32>
    %67 = arith.mulf %63, %30 : vector<8x32xf32>
    %68 = arith.mulf %62, %66 : vector<8x32xf32>
    %69 = arith.addf %67, %68 : vector<8x32xf32>
    %70 = math.tanh %69 : vector<8x32xf32>
    %71 = arith.mulf %64, %70 : vector<8x32xf32>
    %72 = tpu.concatenate %71, %51 in 1 : vector<8x32xf32>, vector<8x32xf32> -> vector<8x64xf32>
    %cst_26 = arith.constant dense<0.000000e+00> : vector<8x128xf32>
    %73 = tpu.matmul %72, %10, %cst_26 {dimension_numbers = #tpu.dot_dimension_numbers<[1], [0], [0], [1], [0, 0, 1, 1], [], []>} : vector<8x64xf32>, vector<64x128xf32>, vector<8x128xf32> -> vector<8x128xf32>
    %74 = vector.broadcast %11 : vector<1x128xf32> to vector<8x128xf32>
    %75 = arith.addf %73, %74 : vector<8x128xf32>
    %76 = arith.negf %75 : vector<8x128xf32>
    %77 = math.exp %76 : vector<8x128xf32>
    %cst_27 = arith.constant 1.000000e+00 : f32
    %78 = vector.broadcast %cst_27 : f32 to vector<8x128xf32>
    %79 = arith.addf %78, %77 : vector<8x128xf32>
    %80 = arith.divf %78, %79 : vector<8x128xf32>
    %81 = vector.extract_strided_slice %80 {offsets = [0, 0], sizes = [8, 32], strides = [1, 1]} : vector<8x128xf32> to vector<8x32xf32>
    %82 = vector.extract_strided_slice %80 {offsets = [0, 32], sizes = [8, 32], strides = [1, 1]} : vector<8x128xf32> to vector<8x32xf32>
    %83 = vector.extract_strided_slice %80 {offsets = [0, 96], sizes = [8, 32], strides = [1, 1]} : vector<8x128xf32> to vector<8x32xf32>
    %84 = vector.extract_strided_slice %75 {offsets = [0, 64], sizes = [8, 32], strides = [1, 1]} : vector<8x128xf32> to vector<8x32xf32>
    %85 = math.tanh %84 : vector<8x32xf32>
    %86 = arith.mulf %82, %49 : vector<8x32xf32>
    %87 = arith.mulf %81, %85 : vector<8x32xf32>
    %88 = arith.addf %86, %87 : vector<8x32xf32>
    %89 = math.tanh %88 : vector<8x32xf32>
    %90 = arith.mulf %83, %89 : vector<8x32xf32>
    %c2_i32 = arith.constant 2 : i32
    %91 = arith.index_cast %c2_i32 : i32 to index
    %c0_28 = arith.constant 0 : index
    %c0_29 = arith.constant 0 : index
    %92 = vector.load %arg12[%91, %c0_28, %c0_29] : memref<8x8x128xf32, #tpu.memory_space<vmem>>, vector<1x8x128xf32>
    %93 = vector.shape_cast %92 : vector<1x8x128xf32> to vector<8x128xf32>
    %cst_30 = arith.constant dense<0.000000e+00> : vector<8x128xf32>
    %94 = tpu.matmul %71, %9, %cst_30 {dimension_numbers = #tpu.dot_dimension_numbers<[1], [0], [0], [1], [0, 0, 1, 1], [], []>} : vector<8x32xf32>, vector<32x128xf32>, vector<8x128xf32> -> vector<8x128xf32>
    %95 = arith.addf %93, %94 : vector<8x128xf32>
    %96 = arith.negf %95 : vector<8x128xf32>
    %97 = math.exp %96 : vector<8x128xf32>
    %cst_31 = arith.constant 1.000000e+00 : f32
    %98 = vector.broadcast %cst_31 : f32 to vector<8x128xf32>
    %99 = arith.addf %98, %97 : vector<8x128xf32>
    %100 = arith.divf %98, %99 : vector<8x128xf32>
    %101 = vector.extract_strided_slice %100 {offsets = [0, 0], sizes = [8, 32], strides = [1, 1]} : vector<8x128xf32> to vector<8x32xf32>
    %102 = vector.extract_strided_slice %100 {offsets = [0, 32], sizes = [8, 32], strides = [1, 1]} : vector<8x128xf32> to vector<8x32xf32>
    %103 = vector.extract_strided_slice %100 {offsets = [0, 96], sizes = [8, 32], strides = [1, 1]} : vector<8x128xf32> to vector<8x32xf32>
    %104 = vector.extract_strided_slice %95 {offsets = [0, 64], sizes = [8, 32], strides = [1, 1]} : vector<8x128xf32> to vector<8x32xf32>
    %105 = math.tanh %104 : vector<8x32xf32>
    %106 = arith.mulf %102, %69 : vector<8x32xf32>
    %107 = arith.mulf %101, %105 : vector<8x32xf32>
    %108 = arith.addf %106, %107 : vector<8x32xf32>
    %109 = math.tanh %108 : vector<8x32xf32>
    %110 = arith.mulf %103, %109 : vector<8x32xf32>
    %111 = tpu.concatenate %110, %90 in 1 : vector<8x32xf32>, vector<8x32xf32> -> vector<8x64xf32>
    %cst_32 = arith.constant dense<0.000000e+00> : vector<8x128xf32>
    %112 = tpu.matmul %111, %10, %cst_32 {dimension_numbers = #tpu.dot_dimension_numbers<[1], [0], [0], [1], [0, 0, 1, 1], [], []>} : vector<8x64xf32>, vector<64x128xf32>, vector<8x128xf32> -> vector<8x128xf32>
    %113 = vector.broadcast %11 : vector<1x128xf32> to vector<8x128xf32>
    %114 = arith.addf %112, %113 : vector<8x128xf32>
    %115 = arith.negf %114 : vector<8x128xf32>
    %116 = math.exp %115 : vector<8x128xf32>
    %cst_33 = arith.constant 1.000000e+00 : f32
    %117 = vector.broadcast %cst_33 : f32 to vector<8x128xf32>
    %118 = arith.addf %117, %116 : vector<8x128xf32>
    %119 = arith.divf %117, %118 : vector<8x128xf32>
    %120 = vector.extract_strided_slice %119 {offsets = [0, 0], sizes = [8, 32], strides = [1, 1]} : vector<8x128xf32> to vector<8x32xf32>
    %121 = vector.extract_strided_slice %119 {offsets = [0, 32], sizes = [8, 32], strides = [1, 1]} : vector<8x128xf32> to vector<8x32xf32>
    %122 = vector.extract_strided_slice %119 {offsets = [0, 96], sizes = [8, 32], strides = [1, 1]} : vector<8x128xf32> to vector<8x32xf32>
    %123 = vector.extract_strided_slice %114 {offsets = [0, 64], sizes = [8, 32], strides = [1, 1]} : vector<8x128xf32> to vector<8x32xf32>
    %124 = math.tanh %123 : vector<8x32xf32>
    %125 = arith.mulf %121, %88 : vector<8x32xf32>
    %126 = arith.mulf %120, %124 : vector<8x32xf32>
    %127 = arith.addf %125, %126 : vector<8x32xf32>
    %128 = math.tanh %127 : vector<8x32xf32>
    %129 = arith.mulf %122, %128 : vector<8x32xf32>
    %c3_i32 = arith.constant 3 : i32
    %130 = arith.index_cast %c3_i32 : i32 to index
    %c0_34 = arith.constant 0 : index
    %c0_35 = arith.constant 0 : index
    %131 = vector.load %arg12[%130, %c0_34, %c0_35] : memref<8x8x128xf32, #tpu.memory_space<vmem>>, vector<1x8x128xf32>
    %132 = vector.shape_cast %131 : vector<1x8x128xf32> to vector<8x128xf32>
    %cst_36 = arith.constant dense<0.000000e+00> : vector<8x128xf32>
    %133 = tpu.matmul %110, %9, %cst_36 {dimension_numbers = #tpu.dot_dimension_numbers<[1], [0], [0], [1], [0, 0, 1, 1], [], []>} : vector<8x32xf32>, vector<32x128xf32>, vector<8x128xf32> -> vector<8x128xf32>
    %134 = arith.addf %132, %133 : vector<8x128xf32>
    %135 = arith.negf %134 : vector<8x128xf32>
    %136 = math.exp %135 : vector<8x128xf32>
    %cst_37 = arith.constant 1.000000e+00 : f32
    %137 = vector.broadcast %cst_37 : f32 to vector<8x128xf32>
    %138 = arith.addf %137, %136 : vector<8x128xf32>
    %139 = arith.divf %137, %138 : vector<8x128xf32>
    %140 = vector.extract_strided_slice %139 {offsets = [0, 0], sizes = [8, 32], strides = [1, 1]} : vector<8x128xf32> to vector<8x32xf32>
    %141 = vector.extract_strided_slice %139 {offsets = [0, 32], sizes = [8, 32], strides = [1, 1]} : vector<8x128xf32> to vector<8x32xf32>
    %142 = vector.extract_strided_slice %139 {offsets = [0, 96], sizes = [8, 32], strides = [1, 1]} : vector<8x128xf32> to vector<8x32xf32>
    %143 = vector.extract_strided_slice %134 {offsets = [0, 64], sizes = [8, 32], strides = [1, 1]} : vector<8x128xf32> to vector<8x32xf32>
    %144 = math.tanh %143 : vector<8x32xf32>
    %145 = arith.mulf %141, %108 : vector<8x32xf32>
    %146 = arith.mulf %140, %144 : vector<8x32xf32>
    %147 = arith.addf %145, %146 : vector<8x32xf32>
    %148 = math.tanh %147 : vector<8x32xf32>
    %149 = arith.mulf %142, %148 : vector<8x32xf32>
    %150 = tpu.concatenate %149, %129 in 1 : vector<8x32xf32>, vector<8x32xf32> -> vector<8x64xf32>
    %cst_38 = arith.constant dense<0.000000e+00> : vector<8x128xf32>
    %151 = tpu.matmul %150, %10, %cst_38 {dimension_numbers = #tpu.dot_dimension_numbers<[1], [0], [0], [1], [0, 0, 1, 1], [], []>} : vector<8x64xf32>, vector<64x128xf32>, vector<8x128xf32> -> vector<8x128xf32>
    %152 = vector.broadcast %11 : vector<1x128xf32> to vector<8x128xf32>
    %153 = arith.addf %151, %152 : vector<8x128xf32>
    %154 = arith.negf %153 : vector<8x128xf32>
    %155 = math.exp %154 : vector<8x128xf32>
    %cst_39 = arith.constant 1.000000e+00 : f32
    %156 = vector.broadcast %cst_39 : f32 to vector<8x128xf32>
    %157 = arith.addf %156, %155 : vector<8x128xf32>
    %158 = arith.divf %156, %157 : vector<8x128xf32>
    %159 = vector.extract_strided_slice %158 {offsets = [0, 0], sizes = [8, 32], strides = [1, 1]} : vector<8x128xf32> to vector<8x32xf32>
    %160 = vector.extract_strided_slice %158 {offsets = [0, 32], sizes = [8, 32], strides = [1, 1]} : vector<8x128xf32> to vector<8x32xf32>
    %161 = vector.extract_strided_slice %158 {offsets = [0, 96], sizes = [8, 32], strides = [1, 1]} : vector<8x128xf32> to vector<8x32xf32>
    %162 = vector.extract_strided_slice %153 {offsets = [0, 64], sizes = [8, 32], strides = [1, 1]} : vector<8x128xf32> to vector<8x32xf32>
    %163 = math.tanh %162 : vector<8x32xf32>
    %164 = arith.mulf %160, %127 : vector<8x32xf32>
    %165 = arith.mulf %159, %163 : vector<8x32xf32>
    %166 = arith.addf %164, %165 : vector<8x32xf32>
    %167 = math.tanh %166 : vector<8x32xf32>
    %168 = arith.mulf %161, %167 : vector<8x32xf32>
    %c4_i32 = arith.constant 4 : i32
    %169 = arith.index_cast %c4_i32 : i32 to index
    %c0_40 = arith.constant 0 : index
    %c0_41 = arith.constant 0 : index
    %170 = vector.load %arg12[%169, %c0_40, %c0_41] : memref<8x8x128xf32, #tpu.memory_space<vmem>>, vector<1x8x128xf32>
    %171 = vector.shape_cast %170 : vector<1x8x128xf32> to vector<8x128xf32>
    %cst_42 = arith.constant dense<0.000000e+00> : vector<8x128xf32>
    %172 = tpu.matmul %149, %9, %cst_42 {dimension_numbers = #tpu.dot_dimension_numbers<[1], [0], [0], [1], [0, 0, 1, 1], [], []>} : vector<8x32xf32>, vector<32x128xf32>, vector<8x128xf32> -> vector<8x128xf32>
    %173 = arith.addf %171, %172 : vector<8x128xf32>
    %174 = arith.negf %173 : vector<8x128xf32>
    %175 = math.exp %174 : vector<8x128xf32>
    %cst_43 = arith.constant 1.000000e+00 : f32
    %176 = vector.broadcast %cst_43 : f32 to vector<8x128xf32>
    %177 = arith.addf %176, %175 : vector<8x128xf32>
    %178 = arith.divf %176, %177 : vector<8x128xf32>
    %179 = vector.extract_strided_slice %178 {offsets = [0, 0], sizes = [8, 32], strides = [1, 1]} : vector<8x128xf32> to vector<8x32xf32>
    %180 = vector.extract_strided_slice %178 {offsets = [0, 32], sizes = [8, 32], strides = [1, 1]} : vector<8x128xf32> to vector<8x32xf32>
    %181 = vector.extract_strided_slice %178 {offsets = [0, 96], sizes = [8, 32], strides = [1, 1]} : vector<8x128xf32> to vector<8x32xf32>
    %182 = vector.extract_strided_slice %173 {offsets = [0, 64], sizes = [8, 32], strides = [1, 1]} : vector<8x128xf32> to vector<8x32xf32>
    %183 = math.tanh %182 : vector<8x32xf32>
    %184 = arith.mulf %180, %147 : vector<8x32xf32>
    %185 = arith.mulf %179, %183 : vector<8x32xf32>
    %186 = arith.addf %184, %185 : vector<8x32xf32>
    %187 = math.tanh %186 : vector<8x32xf32>
    %188 = arith.mulf %181, %187 : vector<8x32xf32>
    %189 = tpu.concatenate %188, %168 in 1 : vector<8x32xf32>, vector<8x32xf32> -> vector<8x64xf32>
    %cst_44 = arith.constant dense<0.000000e+00> : vector<8x128xf32>
    %190 = tpu.matmul %189, %10, %cst_44 {dimension_numbers = #tpu.dot_dimension_numbers<[1], [0], [0], [1], [0, 0, 1, 1], [], []>} : vector<8x64xf32>, vector<64x128xf32>, vector<8x128xf32> -> vector<8x128xf32>
    %191 = vector.broadcast %11 : vector<1x128xf32> to vector<8x128xf32>
    %192 = arith.addf %190, %191 : vector<8x128xf32>
    %193 = arith.negf %192 : vector<8x128xf32>
    %194 = math.exp %193 : vector<8x128xf32>
    %cst_45 = arith.constant 1.000000e+00 : f32
    %195 = vector.broadcast %cst_45 : f32 to vector<8x128xf32>
    %196 = arith.addf %195, %194 : vector<8x128xf32>
    %197 = arith.divf %195, %196 : vector<8x128xf32>
    %198 = vector.extract_strided_slice %197 {offsets = [0, 0], sizes = [8, 32], strides = [1, 1]} : vector<8x128xf32> to vector<8x32xf32>
    %199 = vector.extract_strided_slice %197 {offsets = [0, 32], sizes = [8, 32], strides = [1, 1]} : vector<8x128xf32> to vector<8x32xf32>
    %200 = vector.extract_strided_slice %197 {offsets = [0, 96], sizes = [8, 32], strides = [1, 1]} : vector<8x128xf32> to vector<8x32xf32>
    %201 = vector.extract_strided_slice %192 {offsets = [0, 64], sizes = [8, 32], strides = [1, 1]} : vector<8x128xf32> to vector<8x32xf32>
    %202 = math.tanh %201 : vector<8x32xf32>
    %203 = arith.mulf %199, %166 : vector<8x32xf32>
    %204 = arith.mulf %198, %202 : vector<8x32xf32>
    %205 = arith.addf %203, %204 : vector<8x32xf32>
    %206 = math.tanh %205 : vector<8x32xf32>
    %207 = arith.mulf %200, %206 : vector<8x32xf32>
    %c5_i32 = arith.constant 5 : i32
    %208 = arith.index_cast %c5_i32 : i32 to index
    %c0_46 = arith.constant 0 : index
    %c0_47 = arith.constant 0 : index
    %209 = vector.load %arg12[%208, %c0_46, %c0_47] : memref<8x8x128xf32, #tpu.memory_space<vmem>>, vector<1x8x128xf32>
    %210 = vector.shape_cast %209 : vector<1x8x128xf32> to vector<8x128xf32>
    %cst_48 = arith.constant dense<0.000000e+00> : vector<8x128xf32>
    %211 = tpu.matmul %188, %9, %cst_48 {dimension_numbers = #tpu.dot_dimension_numbers<[1], [0], [0], [1], [0, 0, 1, 1], [], []>} : vector<8x32xf32>, vector<32x128xf32>, vector<8x128xf32> -> vector<8x128xf32>
    %212 = arith.addf %210, %211 : vector<8x128xf32>
    %213 = arith.negf %212 : vector<8x128xf32>
    %214 = math.exp %213 : vector<8x128xf32>
    %cst_49 = arith.constant 1.000000e+00 : f32
    %215 = vector.broadcast %cst_49 : f32 to vector<8x128xf32>
    %216 = arith.addf %215, %214 : vector<8x128xf32>
    %217 = arith.divf %215, %216 : vector<8x128xf32>
    %218 = vector.extract_strided_slice %217 {offsets = [0, 0], sizes = [8, 32], strides = [1, 1]} : vector<8x128xf32> to vector<8x32xf32>
    %219 = vector.extract_strided_slice %217 {offsets = [0, 32], sizes = [8, 32], strides = [1, 1]} : vector<8x128xf32> to vector<8x32xf32>
    %220 = vector.extract_strided_slice %217 {offsets = [0, 96], sizes = [8, 32], strides = [1, 1]} : vector<8x128xf32> to vector<8x32xf32>
    %221 = vector.extract_strided_slice %212 {offsets = [0, 64], sizes = [8, 32], strides = [1, 1]} : vector<8x128xf32> to vector<8x32xf32>
    %222 = math.tanh %221 : vector<8x32xf32>
    %223 = arith.mulf %219, %186 : vector<8x32xf32>
    %224 = arith.mulf %218, %222 : vector<8x32xf32>
    %225 = arith.addf %223, %224 : vector<8x32xf32>
    %226 = math.tanh %225 : vector<8x32xf32>
    %227 = arith.mulf %220, %226 : vector<8x32xf32>
    %228 = tpu.concatenate %227, %207 in 1 : vector<8x32xf32>, vector<8x32xf32> -> vector<8x64xf32>
    %cst_50 = arith.constant dense<0.000000e+00> : vector<8x128xf32>
    %229 = tpu.matmul %228, %10, %cst_50 {dimension_numbers = #tpu.dot_dimension_numbers<[1], [0], [0], [1], [0, 0, 1, 1], [], []>} : vector<8x64xf32>, vector<64x128xf32>, vector<8x128xf32> -> vector<8x128xf32>
    %230 = vector.broadcast %11 : vector<1x128xf32> to vector<8x128xf32>
    %231 = arith.addf %229, %230 : vector<8x128xf32>
    %232 = arith.negf %231 : vector<8x128xf32>
    %233 = math.exp %232 : vector<8x128xf32>
    %cst_51 = arith.constant 1.000000e+00 : f32
    %234 = vector.broadcast %cst_51 : f32 to vector<8x128xf32>
    %235 = arith.addf %234, %233 : vector<8x128xf32>
    %236 = arith.divf %234, %235 : vector<8x128xf32>
    %237 = vector.extract_strided_slice %236 {offsets = [0, 0], sizes = [8, 32], strides = [1, 1]} : vector<8x128xf32> to vector<8x32xf32>
    %238 = vector.extract_strided_slice %236 {offsets = [0, 32], sizes = [8, 32], strides = [1, 1]} : vector<8x128xf32> to vector<8x32xf32>
    %239 = vector.extract_strided_slice %236 {offsets = [0, 96], sizes = [8, 32], strides = [1, 1]} : vector<8x128xf32> to vector<8x32xf32>
    %240 = vector.extract_strided_slice %231 {offsets = [0, 64], sizes = [8, 32], strides = [1, 1]} : vector<8x128xf32> to vector<8x32xf32>
    %241 = math.tanh %240 : vector<8x32xf32>
    %242 = arith.mulf %238, %205 : vector<8x32xf32>
    %243 = arith.mulf %237, %241 : vector<8x32xf32>
    %244 = arith.addf %242, %243 : vector<8x32xf32>
    %245 = math.tanh %244 : vector<8x32xf32>
    %246 = arith.mulf %239, %245 : vector<8x32xf32>
    %c6_i32 = arith.constant 6 : i32
    %247 = arith.index_cast %c6_i32 : i32 to index
    %c0_52 = arith.constant 0 : index
    %c0_53 = arith.constant 0 : index
    %248 = vector.load %arg12[%247, %c0_52, %c0_53] : memref<8x8x128xf32, #tpu.memory_space<vmem>>, vector<1x8x128xf32>
    %249 = vector.shape_cast %248 : vector<1x8x128xf32> to vector<8x128xf32>
    %cst_54 = arith.constant dense<0.000000e+00> : vector<8x128xf32>
    %250 = tpu.matmul %227, %9, %cst_54 {dimension_numbers = #tpu.dot_dimension_numbers<[1], [0], [0], [1], [0, 0, 1, 1], [], []>} : vector<8x32xf32>, vector<32x128xf32>, vector<8x128xf32> -> vector<8x128xf32>
    %251 = arith.addf %249, %250 : vector<8x128xf32>
    %252 = arith.negf %251 : vector<8x128xf32>
    %253 = math.exp %252 : vector<8x128xf32>
    %cst_55 = arith.constant 1.000000e+00 : f32
    %254 = vector.broadcast %cst_55 : f32 to vector<8x128xf32>
    %255 = arith.addf %254, %253 : vector<8x128xf32>
    %256 = arith.divf %254, %255 : vector<8x128xf32>
    %257 = vector.extract_strided_slice %256 {offsets = [0, 0], sizes = [8, 32], strides = [1, 1]} : vector<8x128xf32> to vector<8x32xf32>
    %258 = vector.extract_strided_slice %256 {offsets = [0, 32], sizes = [8, 32], strides = [1, 1]} : vector<8x128xf32> to vector<8x32xf32>
    %259 = vector.extract_strided_slice %256 {offsets = [0, 96], sizes = [8, 32], strides = [1, 1]} : vector<8x128xf32> to vector<8x32xf32>
    %260 = vector.extract_strided_slice %251 {offsets = [0, 64], sizes = [8, 32], strides = [1, 1]} : vector<8x128xf32> to vector<8x32xf32>
    %261 = math.tanh %260 : vector<8x32xf32>
    %262 = arith.mulf %258, %225 : vector<8x32xf32>
    %263 = arith.mulf %257, %261 : vector<8x32xf32>
    %264 = arith.addf %262, %263 : vector<8x32xf32>
    %265 = math.tanh %264 : vector<8x32xf32>
    %266 = arith.mulf %259, %265 : vector<8x32xf32>
    %267 = tpu.concatenate %266, %246 in 1 : vector<8x32xf32>, vector<8x32xf32> -> vector<8x64xf32>
    %cst_56 = arith.constant dense<0.000000e+00> : vector<8x128xf32>
    %268 = tpu.matmul %267, %10, %cst_56 {dimension_numbers = #tpu.dot_dimension_numbers<[1], [0], [0], [1], [0, 0, 1, 1], [], []>} : vector<8x64xf32>, vector<64x128xf32>, vector<8x128xf32> -> vector<8x128xf32>
    %269 = vector.broadcast %11 : vector<1x128xf32> to vector<8x128xf32>
    %270 = arith.addf %268, %269 : vector<8x128xf32>
    %271 = arith.negf %270 : vector<8x128xf32>
    %272 = math.exp %271 : vector<8x128xf32>
    %cst_57 = arith.constant 1.000000e+00 : f32
    %273 = vector.broadcast %cst_57 : f32 to vector<8x128xf32>
    %274 = arith.addf %273, %272 : vector<8x128xf32>
    %275 = arith.divf %273, %274 : vector<8x128xf32>
    %276 = vector.extract_strided_slice %275 {offsets = [0, 0], sizes = [8, 32], strides = [1, 1]} : vector<8x128xf32> to vector<8x32xf32>
    %277 = vector.extract_strided_slice %275 {offsets = [0, 32], sizes = [8, 32], strides = [1, 1]} : vector<8x128xf32> to vector<8x32xf32>
    %278 = vector.extract_strided_slice %275 {offsets = [0, 96], sizes = [8, 32], strides = [1, 1]} : vector<8x128xf32> to vector<8x32xf32>
    %279 = vector.extract_strided_slice %270 {offsets = [0, 64], sizes = [8, 32], strides = [1, 1]} : vector<8x128xf32> to vector<8x32xf32>
    %280 = math.tanh %279 : vector<8x32xf32>
    %281 = arith.mulf %277, %244 : vector<8x32xf32>
    %282 = arith.mulf %276, %280 : vector<8x32xf32>
    %283 = arith.addf %281, %282 : vector<8x32xf32>
    %284 = math.tanh %283 : vector<8x32xf32>
    %285 = arith.mulf %278, %284 : vector<8x32xf32>
    %c7_i32 = arith.constant 7 : i32
    %286 = arith.index_cast %c7_i32 : i32 to index
    %c0_58 = arith.constant 0 : index
    %c0_59 = arith.constant 0 : index
    %287 = vector.load %arg12[%286, %c0_58, %c0_59] : memref<8x8x128xf32, #tpu.memory_space<vmem>>, vector<1x8x128xf32>
    %288 = vector.shape_cast %287 : vector<1x8x128xf32> to vector<8x128xf32>
    %cst_60 = arith.constant dense<0.000000e+00> : vector<8x128xf32>
    %289 = tpu.matmul %266, %9, %cst_60 {dimension_numbers = #tpu.dot_dimension_numbers<[1], [0], [0], [1], [0, 0, 1, 1], [], []>} : vector<8x32xf32>, vector<32x128xf32>, vector<8x128xf32> -> vector<8x128xf32>
    %290 = arith.addf %288, %289 : vector<8x128xf32>
    %291 = arith.negf %290 : vector<8x128xf32>
    %292 = math.exp %291 : vector<8x128xf32>
    %cst_61 = arith.constant 1.000000e+00 : f32
    %293 = vector.broadcast %cst_61 : f32 to vector<8x128xf32>
    %294 = arith.addf %293, %292 : vector<8x128xf32>
    %295 = arith.divf %293, %294 : vector<8x128xf32>
    %296 = vector.extract_strided_slice %295 {offsets = [0, 0], sizes = [8, 32], strides = [1, 1]} : vector<8x128xf32> to vector<8x32xf32>
    %297 = vector.extract_strided_slice %295 {offsets = [0, 32], sizes = [8, 32], strides = [1, 1]} : vector<8x128xf32> to vector<8x32xf32>
    %298 = vector.extract_strided_slice %295 {offsets = [0, 96], sizes = [8, 32], strides = [1, 1]} : vector<8x128xf32> to vector<8x32xf32>
    %299 = vector.extract_strided_slice %290 {offsets = [0, 64], sizes = [8, 32], strides = [1, 1]} : vector<8x128xf32> to vector<8x32xf32>
    %300 = math.tanh %299 : vector<8x32xf32>
    %301 = arith.mulf %297, %264 : vector<8x32xf32>
    %302 = arith.mulf %296, %300 : vector<8x32xf32>
    %303 = arith.addf %301, %302 : vector<8x32xf32>
    %304 = math.tanh %303 : vector<8x32xf32>
    %305 = arith.mulf %298, %304 : vector<8x32xf32>
    %306 = tpu.concatenate %305, %285 in 1 : vector<8x32xf32>, vector<8x32xf32> -> vector<8x64xf32>
    %cst_62 = arith.constant dense<0.000000e+00> : vector<8x128xf32>
    %307 = tpu.matmul %306, %10, %cst_62 {dimension_numbers = #tpu.dot_dimension_numbers<[1], [0], [0], [1], [0, 0, 1, 1], [], []>} : vector<8x64xf32>, vector<64x128xf32>, vector<8x128xf32> -> vector<8x128xf32>
    %308 = vector.broadcast %11 : vector<1x128xf32> to vector<8x128xf32>
    %309 = arith.addf %307, %308 : vector<8x128xf32>
    %310 = arith.negf %309 : vector<8x128xf32>
    %311 = math.exp %310 : vector<8x128xf32>
    %cst_63 = arith.constant 1.000000e+00 : f32
    %312 = vector.broadcast %cst_63 : f32 to vector<8x128xf32>
    %313 = arith.addf %312, %311 : vector<8x128xf32>
    %314 = arith.divf %312, %313 : vector<8x128xf32>
    %315 = vector.extract_strided_slice %314 {offsets = [0, 0], sizes = [8, 32], strides = [1, 1]} : vector<8x128xf32> to vector<8x32xf32>
    %316 = vector.extract_strided_slice %314 {offsets = [0, 32], sizes = [8, 32], strides = [1, 1]} : vector<8x128xf32> to vector<8x32xf32>
    %317 = vector.extract_strided_slice %314 {offsets = [0, 96], sizes = [8, 32], strides = [1, 1]} : vector<8x128xf32> to vector<8x32xf32>
    %318 = vector.extract_strided_slice %309 {offsets = [0, 64], sizes = [8, 32], strides = [1, 1]} : vector<8x128xf32> to vector<8x32xf32>
    %319 = math.tanh %318 : vector<8x32xf32>
    %320 = arith.mulf %316, %283 : vector<8x32xf32>
    %321 = arith.mulf %315, %319 : vector<8x32xf32>
    %322 = arith.addf %320, %321 : vector<8x32xf32>
    %323 = math.tanh %322 : vector<8x32xf32>
    %324 = arith.mulf %317, %323 : vector<8x32xf32>
    %c8_i32 = arith.constant 8 : i32
    %c0_64 = arith.constant 0 : index
    %c0_65 = arith.constant 0 : index
    %325 = vector.load %arg7[%c0_64, %c0_65] : memref<32x64xf32, #tpu.memory_space<vmem>>, vector<32x64xf32>
    %cst_66 = arith.constant dense<0.000000e+00> : vector<8x64xf32>
    %326 = tpu.matmul %324, %325, %cst_66 {dimension_numbers = #tpu.dot_dimension_numbers<[1], [0], [0], [1], [0, 0, 1, 1], [], []>} : vector<8x32xf32>, vector<32x64xf32>, vector<8x64xf32> -> vector<8x64xf32>
    %c0_67 = arith.constant 0 : index
    %c0_68 = arith.constant 0 : index
    %327 = vector.load %arg8[%c0_67, %c0_68] : memref<1x64xf32, #tpu.memory_space<vmem>>, vector<1x64xf32>
    %328 = vector.broadcast %327 : vector<1x64xf32> to vector<8x64xf32>
    %329 = arith.addf %326, %328 : vector<8x64xf32>
    %cst_69 = arith.constant 0.000000e+00 : f32
    %330 = vector.broadcast %cst_69 : f32 to vector<8x64xf32>
    %331 = arith.maximumf %329, %330 : vector<8x64xf32>
    %c0_70 = arith.constant 0 : index
    %c0_71 = arith.constant 0 : index
    %332 = vector.load %arg9[%c0_70, %c0_71] : memref<64x128xf32, #tpu.memory_space<vmem>>, vector<64x128xf32>
    %cst_72 = arith.constant dense<0.000000e+00> : vector<8x128xf32>
    %333 = tpu.matmul %331, %332, %cst_72 {dimension_numbers = #tpu.dot_dimension_numbers<[1], [0], [0], [1], [0, 0, 1, 1], [], []>} : vector<8x64xf32>, vector<64x128xf32>, vector<8x128xf32> -> vector<8x128xf32>
    %c0_73 = arith.constant 0 : index
    %c0_74 = arith.constant 0 : index
    %334 = vector.load %arg10[%c0_73, %c0_74] : memref<1x128xf32, #tpu.memory_space<vmem>>, vector<1x128xf32>
    %335 = vector.broadcast %334 : vector<1x128xf32> to vector<8x128xf32>
    %336 = arith.addf %333, %335 : vector<8x128xf32>
    %337 = tpu.iota {dimensions = array<i32: 1>} : vector<8x128xi32>
    %c10_i32 = arith.constant 10 : i32
    %338 = vector.broadcast %c10_i32 : i32 to vector<8x128xi32>
    %339 = arith.cmpi slt, %337, %338 : vector<8x128xi32>
    %cst_75 = arith.constant 0xFF800000 : f32
    %340 = vector.broadcast %cst_75 : f32 to vector<8x128xf32>
    %341 = arith.select %339, %336, %340 : vector<8x128xi1>, vector<8x128xf32>
    %cst_76 = arith.constant dense<0xFF800000> : vector<8xf32>
    %342 = vector.multi_reduction <maximumf>, %341, %cst_76 [1] : vector<8x128xf32> to vector<8xf32>
    %343 = vector.shape_cast %342 : vector<8xf32> to vector<8x1xf32>
    %344 = vector.broadcast %343 : vector<8x1xf32> to vector<8x128xf32>
    %345 = arith.subf %341, %344 : vector<8x128xf32>
    %346 = math.exp %345 : vector<8x128xf32>
    %cst_77 = arith.constant dense<0.000000e+00> : vector<8xf32>
    %347 = vector.multi_reduction <add>, %346, %cst_77 [1] : vector<8x128xf32> to vector<8xf32>
    %348 = vector.shape_cast %347 : vector<8xf32> to vector<8x1xf32>
    %349 = tpu.reciprocal %348 {approx = true} : vector<8x1xf32> -> vector<8x1xf32>
    %350 = vector.broadcast %349 : vector<8x1xf32> to vector<8x128xf32>
    %351 = arith.mulf %346, %350 : vector<8x128xf32>
    %c0_78 = arith.constant 0 : index
    %c0_79 = arith.constant 0 : index
    %352 = vector.load %arg11[%c0_78, %c0_79] : memref<8x128xf32, #tpu.memory_space<vmem>>, vector<8x128xf32>
    tpu.vector_store %arg11[%c0_78, %c0_79], %351 {strides = array<i32>} : memref<8x128xf32, #tpu.memory_space<vmem>>, vector<8x128xf32>,
    return
  }
  func.func @transform_0(%arg0: i32) -> (i32, i32, i32) {
    %c0_i32 = arith.constant 0 : i32
    %c0_i32_0 = arith.constant 0 : i32
    %c0_i32_1 = arith.constant 0 : i32
    return %c0_i32, %arg0, %c0_i32_0 : i32, i32, i32
  }
  func.func @transform_1(%arg0: i32) -> (i32, i32) {
    %c0_i32 = arith.constant 0 : i32
    %c0_i32_0 = arith.constant 0 : i32
    %c0_i32_1 = arith.constant 0 : i32
    return %c0_i32, %c0_i32_0 : i32, i32
  }
  func.func @transform_2(%arg0: i32) -> (i32, i32) {
    %c0_i32 = arith.constant 0 : i32
    %c0_i32_0 = arith.constant 0 : i32
    %c0_i32_1 = arith.constant 0 : i32
    return %c0_i32, %c0_i32_0 : i32, i32
  }
  func.func @transform_3(%arg0: i32) -> (i32, i32) {
    %c0_i32 = arith.constant 0 : i32
    %c0_i32_0 = arith.constant 0 : i32
    %c0_i32_1 = arith.constant 0 : i32
    return %c0_i32, %c0_i32_0 : i32, i32
  }
  func.func @transform_4(%arg0: i32) -> (i32, i32) {
    %c0_i32 = arith.constant 0 : i32
    %c0_i32_0 = arith.constant 0 : i32
    %c0_i32_1 = arith.constant 0 : i32
    return %c0_i32, %c0_i32_0 : i32, i32
  }
  func.func @transform_5(%arg0: i32) -> (i32, i32) {
    %c0_i32 = arith.constant 0 : i32
    %c0_i32_0 = arith.constant 0 : i32
    %c0_i32_1 = arith.constant 0 : i32
    return %c0_i32, %c0_i32_0 : i32, i32
  }
  func.func @transform_6(%arg0: i32) -> (i32, i32) {
    %c0_i32 = arith.constant 0 : i32
    %c0_i32_0 = arith.constant 0 : i32
    %c0_i32_1 = arith.constant 0 : i32
    return %c0_i32, %c0_i32_0 : i32, i32
  }
  func.func @transform_7(%arg0: i32) -> (i32, i32) {
    %c0_i32 = arith.constant 0 : i32
    %c0_i32_0 = arith.constant 0 : i32
    %c0_i32_1 = arith.constant 0 : i32
    return %c0_i32, %c0_i32_0 : i32, i32
  }
  func.func @transform_8(%arg0: i32) -> (i32, i32) {
    %c0_i32 = arith.constant 0 : i32
    %c0_i32_0 = arith.constant 0 : i32
    %c0_i32_1 = arith.constant 0 : i32
    return %c0_i32, %c0_i32_0 : i32, i32
  }
  func.func @transform_9(%arg0: i32) -> (i32, i32) {
    %c0_i32 = arith.constant 0 : i32
    %c0_i32_0 = arith.constant 0 : i32
    %c0_i32_1 = arith.constant 0 : i32
    return %c0_i32, %c0_i32_0 : i32, i32
  }
  func.func @transform_10(%arg0: i32) -> (i32, i32) {
    %c0_i32 = arith.constant 0 : i32
    %c0_i32_0 = arith.constant 0 : i32
    return %arg0, %c0_i32 : i32, i32
  }
}

</mosaic_0001>

<llo_original>
// kernel: lstm_forward.1
$region0: #{lstm_forward.1}
  #allocation0 [shape = 'u32[]', space=smem, size = 0x4, offset = 0x4, fixed_abs, tag = 'smem constant byte address 0x4 - core index']
  #allocation1 [shape = 'u32[144,128]{1,0:T(1,128)}', space=vmem, size = 0x12000, scoped, tag = 'internal scratch']
  #allocation2 [shape = 'f32[8,8,128]{2,1,0:T(8,128)}', space=vmem, size = 0x8000, scoped, tag = 'scratch operand']
  %s0 = inlined_call_operand.vmem [shape: f32[8,8,16], index: 0, kind: input, shape index: {}]
  %s1 = inlined_call_operand.vmem [shape: f32[16,128], index: 1, kind: input, shape index: {}]
  %s2 = inlined_call_operand.vmem [shape: f32[32,128], index: 2, kind: input, shape index: {}]
  %s3 = inlined_call_operand.vmem [shape: f32[1,128], index: 3, kind: input, shape index: {}]
  %s4 = inlined_call_operand.vmem [shape: f32[64,128], index: 4, kind: input, shape index: {}]
  %s5 = inlined_call_operand.vmem [shape: f32[1,128], index: 5, kind: input, shape index: {}]
  %s6 = inlined_call_operand.vmem [shape: f32[32,64], index: 6, kind: input, shape index: {}]
  %s7 = inlined_call_operand.vmem [shape: f32[1,64], index: 7, kind: input, shape index: {}]
  %s8 = inlined_call_operand.vmem [shape: f32[64,128], index: 8, kind: input, shape index: {}]
  %s9 = inlined_call_operand.vmem [shape: f32[1,128], index: 9, kind: input, shape index: {}]
  %s10 = inlined_call_operand.vmem [shape: f32[8,128], index: 10, kind: output, shape index: {}]
  %s11 = sld [smem:[#allocation0]]
  $region50: #{lstm_forward.1} parent=0
    _
  %s13 = ssub.s32 1, %s11
  %s14 = scalar_select 0, %s13, %s11
  // Predicated region
  $region2: #{lstm_forward.1} parent=0 // pred_check
    _
  $region3: #{lstm_forward.1} parent=0 // pred_check_branch
    %16 = sbr.rel (0) target = $region5
  $region4: #{lstm_forward.1} parent=0 // pred_region
    _
  $region5: #{lstm_forward.1} parent=0 // pred_fallthru
    _
  // Predicated region
  $region6: #{lstm_forward.1} parent=0 // pred_check
    _
  $region7: #{lstm_forward.1} parent=0 // pred_check_branch
    %18 = sbr.rel (0) target = $region9
  $region8: #{lstm_forward.1} parent=0 // pred_region
    _
  $region9: #{lstm_forward.1} parent=0 // pred_fallthru
    _
  // Predicated region
  $region10: #{lstm_forward.1} parent=0 // pred_check
    _
  $region11: #{lstm_forward.1} parent=0 // pred_check_branch
    %20 = sbr.rel (0) target = $region13
  $region12: #{lstm_forward.1} parent=0 // pred_region
    _
  $region13: #{lstm_forward.1} parent=0 // pred_fallthru
    _
  // Predicated region
  $region14: #{lstm_forward.1} parent=0 // pred_check
    _
  $region15: #{lstm_forward.1} parent=0 // pred_check_branch
    %22 = sbr.rel (0) target = $region17
  $region16: #{lstm_forward.1} parent=0 // pred_region
    _
  $region17: #{lstm_forward.1} parent=0 // pred_fallthru
    _
  // Predicated region
  $region18: #{lstm_forward.1} parent=0 // pred_check
    _
  $region19: #{lstm_forward.1} parent=0 // pred_check_branch
    %24 = sbr.rel (0) target = $region21
  $region20: #{lstm_forward.1} parent=0 // pred_region
    _
  $region21: #{lstm_forward.1} parent=0 // pred_fallthru
    _
  // Predicated region
  $region22: #{lstm_forward.1} parent=0 // pred_check
    _
  $region23: #{lstm_forward.1} parent=0 // pred_check_branch
    %26 = sbr.rel (0) target = $region25
  $region24: #{lstm_forward.1} parent=0 // pred_region
    _
  $region25: #{lstm_forward.1} parent=0 // pred_fallthru
    _
  // Predicated region
  $region26: #{lstm_forward.1} parent=0 // pred_check
    _
  $region27: #{lstm_forward.1} parent=0 // pred_check_branch
    %28 = sbr.rel (0) target = $region29
  $region28: #{lstm_forward.1} parent=0 // pred_region
    _
  $region29: #{lstm_forward.1} parent=0 // pred_fallthru
    _
  // Predicated region
  $region30: #{lstm_forward.1} parent=0 // pred_check
    _
  $region31: #{lstm_forward.1} parent=0 // pred_check_branch
    %30 = sbr.rel (0) target = $region33
  $region32: #{lstm_forward.1} parent=0 // pred_region
    _
  $region33: #{lstm_forward.1} parent=0 // pred_fallthru
    _
  // Predicated region
  $region34: #{lstm_forward.1} parent=0 // pred_check
    _
  $region35: #{lstm_forward.1} parent=0 // pred_check_branch
    %32 = sbr.rel (0) target = $region37
  $region36: #{lstm_forward.1} parent=0 // pred_region
    _
  $region37: #{lstm_forward.1} parent=0 // pred_fallthru
    _
  // Predicated region
  $region38: #{lstm_forward.1} parent=0 // pred_check
    _
  $region39: #{lstm_forward.1} parent=0 // pred_check_branch
    %34 = sbr.rel (0) target = $region41
  $region40: #{lstm_forward.1} parent=0 // pred_region
    _
  $region41: #{lstm_forward.1} parent=0 // pred_fallthru
    _
  %v35 = vld [vmem:[%s0] sm:$0xff]
  %v36 = vld [vmem:[%s0 + $0x8] sm:$0xff]
  %v37 = vld [vmem:[%s0 + $0x10] sm:$0xff]
  %v38 = vld [vmem:[%s0 + $0x18] sm:$0xff]
  %v39 = vld [vmem:[%s0 + $0x20] sm:$0xff]
  %v40 = vld [vmem:[%s0 + $0x28] sm:$0xff]
  %v41 = vld [vmem:[%s0 + $0x30] sm:$0xff]
  %v42 = vld [vmem:[%s0 + $0x38] sm:$0xff]
  %v43 = vld [vmem:[%s1] sm:$0xff]
  %v44 = vld [vmem:[%s1 + $0x8] sm:$0xff]
  %v45 = vld [vmem:[%s3] sm:$0x1]
  %v47 = vlaneseq
  %v48 = vshrl.u32 %v47, 7
  %v49 = vsub.s32 0, %v48
  %v50 = vrot.slane %v45, %v49
  %vm52 = vcmask 130048
  %v54 = vsel %vm52, %v35, 0
  %v57 = vsel %vm52, %v36, 0
  %v60 = vsel %vm52, %v37, 0
  %v63 = vsel %vm52, %v38, 0
  %v66 = vsel %vm52, %v39, 0
  %v69 = vsel %vm52, %v40, 0
  %v72 = vsel %vm52, %v41, 0
  %v75 = vsel %vm52, %v42, 0
  %77 = vmatprep.subr.mxu0 0.0
  %78 = vmatpush1.msra.mxu0 %v43
  %79 = vmatprep.subr.mxu0 0.0
  %80 = vmatpush1.msra.mxu0 %v44
  %81 = vmatprep.subr.mxu0 0.0
  %82 = vmatpush1.msra.mxu0 0.0
  %83 = vmatprep.subr.mxu0 0.0
  %84 = vmatpush1.msra.mxu0 0.0
  %85 = vmatprep.subr.mxu0 0.0
  %86 = vmatpush1.msra.mxu0 0.0
  %87 = vmatprep.subr.mxu0 0.0
  %88 = vmatpush1.msra.mxu0 0.0
  %89 = vmatprep.subr.mxu0 0.0
  %90 = vmatpush1.msra.mxu0 0.0
  %91 = vmatprep.subr.mxu0 0.0
  %92 = vmatpush1.msra.mxu0 0.0
  %93 = vmatprep.subr.mxu0 0.0
  %94 = vmatpush1.msra.mxu0 0.0
  %95 = vmatprep.subr.mxu0 0.0
  %96 = vmatpush1.msra.mxu0 0.0
  %97 = vmatprep.subr.mxu0 0.0
  %98 = vmatpush1.msra.mxu0 0.0
  %99 = vmatprep.subr.mxu0 0.0
  %100 = vmatpush1.msra.mxu0 0.0
  %101 = vmatprep.subr.mxu0 0.0
  %102 = vmatpush1.msra.mxu0 0.0
  %103 = vmatprep.subr.mxu0 0.0
  %104 = vmatpush1.msra.mxu0 0.0
  %105 = vmatprep.subr.mxu0 0.0
  %106 = vmatpush1.msra.mxu0 0.0
  %107 = vmatprep.subr.mxu0 0.0
  %108 = vmatpush1.msra.mxu0 0.0
  %109 = vmatprep.subr.mxu0 0.0
  %110 = vmatpush1.msra.mxu0 0.0
  %111 = vmatprep.subr.mxu0 0.0
  %112 = vmatpush1.msra.mxu0 0.0
  %113 = vmatprep.subr.mxu0 0.0
  %114 = vmatpush1.msra.mxu0 0.0
  %115 = vmatprep.subr.mxu0 0.0
  %116 = vmatpush1.msra.mxu0 0.0
  %117 = vmatprep.subr.mxu0 0.0
  %118 = vmatpush1.msra.mxu0 0.0
  %119 = vmatprep.subr.mxu0 0.0
  %120 = vmatpush1.msra.mxu0 0.0
  %121 = vmatprep.subr.mxu0 0.0
  %122 = vmatpush1.msra.mxu0 0.0
  %123 = vmatprep.subr.mxu0 0.0
  %124 = vmatpush1.msra.mxu0 0.0
  %125 = vmatprep.subr.mxu0 0.0
  %126 = vmatpush1.msra.mxu0 0.0
  %127 = vmatprep.subr.mxu0 0.0
  %128 = vmatpush1.msra.mxu0 0.0
  %129 = vmatprep.subr.mxu0 0.0
  %130 = vmatpush1.msra.mxu0 0.0
  %131 = vmatprep.subr.mxu0 0.0
  %132 = vmatpush1.msra.mxu0 0.0
  %133 = vmatprep.subr.mxu0 0.0
  %134 = vmatpush1.msra.mxu0 0.0
  %135 = vmatprep.subr.mxu0 0.0
  %136 = vmatpush1.msra.mxu0 0.0
  %137 = vmatprep.subr.mxu0 0.0
  %138 = vmatpush1.msra.mxu0 0.0
  %139 = vmatprep.subr.mxu0 0.0
  %140 = vmatpush1.msra.mxu0 0.0
  %141 = vmatprep.mubr.f32.mxu0 0.0
  %142 = vmatmul.mubr.f32.gmra.mrb[0].mxu0 %v54
  %v143 = vpop.f32.mrb[0].mxu0
  %v144 = vadd.f32 %v50, %v143
  %v145 = vpop.f32.mrb[0].mxu0
  %146 = vmatprep.mubr.f32.mxu0 0.0
  %147 = vmatmul.mubr.f32.gmra.mrb[0].mxu0 %v57
  %v148 = vpop.f32.mrb[0].mxu0
  %v149 = vadd.f32 %v50, %v148
  %v150 = vpop.f32.mrb[0].mxu0
  %151 = vmatprep.mubr.f32.mxu0 0.0
  %152 = vmatmul.mubr.f32.gmra.mrb[0].mxu0 %v60
  %v153 = vpop.f32.mrb[0].mxu0
  %v154 = vadd.f32 %v50, %v153
  %v155 = vpop.f32.mrb[0].mxu0
  %156 = vmatprep.mubr.f32.mxu0 0.0
  %157 = vmatmul.mubr.f32.gmra.mrb[0].mxu0 %v63
  %v158 = vpop.f32.mrb[0].mxu0
  %v159 = vadd.f32 %v50, %v158
  %v160 = vpop.f32.mrb[0].mxu0
  %161 = vmatprep.mubr.f32.mxu0 0.0
  %162 = vmatmul.mubr.f32.gmra.mrb[0].mxu0 %v66
  %v163 = vpop.f32.mrb[0].mxu0
  %v164 = vadd.f32 %v50, %v163
  %v165 = vpop.f32.mrb[0].mxu0
  %166 = vmatprep.mubr.f32.mxu0 0.0
  %167 = vmatmul.mubr.f32.gmra.mrb[0].mxu0 %v69
  %v168 = vpop.f32.mrb[0].mxu0
  %v169 = vadd.f32 %v50, %v168
  %v170 = vpop.f32.mrb[0].mxu0
  %171 = vmatprep.mubr.f32.mxu0 0.0
  %172 = vmatmul.mubr.f32.gmra.mrb[0].mxu0 %v72
  %v173 = vpop.f32.mrb[0].mxu0
  %v174 = vadd.f32 %v50, %v173
  %v175 = vpop.f32.mrb[0].mxu0
  %176 = vmatprep.mubr.f32.mxu0 0.0
  %177 = vmatmul.mubr.f32.gmra.mrb[0].mxu0 %v75
  %v178 = vpop.f32.mrb[0].mxu0
  %v179 = vadd.f32 %v50, %v178
  %v180 = vpop.f32.mrb[0].mxu0
  %181 = vdwg.mxu0
  %182 = vst [vmem:[#allocation2] sm:$0xff] %v144
  %183 = vst [vmem:[#allocation2 + $0x8] sm:$0xff] %v149
  %184 = vst [vmem:[#allocation2 + $0x10] sm:$0xff] %v154
  %185 = vst [vmem:[#allocation2 + $0x18] sm:$0xff] %v159
  %186 = vst [vmem:[#allocation2 + $0x20] sm:$0xff] %v164
  %187 = vst [vmem:[#allocation2 + $0x28] sm:$0xff] %v169
  %188 = vst [vmem:[#allocation2 + $0x30] sm:$0xff] %v174
  %189 = vst [vmem:[#allocation2 + $0x38] sm:$0xff] %v179
  %v190 = vld [vmem:[%s2] sm:$0xff]
  %v191 = vld [vmem:[%s2 + $0x8] sm:$0xff]
  %v192 = vld [vmem:[%s2 + $0x10] sm:$0xff]
  %v193 = vld [vmem:[%s2 + $0x18] sm:$0xff]
  %v194 = vld [vmem:[%s4] sm:$0xff]
  %v195 = vld [vmem:[%s4 + $0x8] sm:$0xff]
  %v196 = vld [vmem:[%s4 + $0x10] sm:$0xff]
  %v197 = vld [vmem:[%s4 + $0x18] sm:$0xff]
  %v198 = vld [vmem:[%s4 + $0x20] sm:$0xff]
  %v199 = vld [vmem:[%s4 + $0x28] sm:$0xff]
  %v200 = vld [vmem:[%s4 + $0x30] sm:$0xff]
  %v201 = vld [vmem:[%s4 + $0x38] sm:$0xff]
  %v202 = vld [vmem:[%s5] sm:$0x1]
  %v203 = vld [vmem:[#allocation2] sm:$0xff]
  %vm204 = vcmask 261120
  %v206 = vsel %vm204, 0.0, 0
  %208 = vmatprep.subr.mxu0 0.0
  %209 = vmatpush1.msra.mxu0 %v190
  %210 = vmatprep.subr.mxu0 0.0
  %211 = vmatpush1.msra.mxu0 %v191
  %212 = vmatprep.subr.mxu0 0.0
  %213 = vmatpush1.msra.mxu0 %v192
  %214 = vmatprep.subr.mxu0 0.0
  %215 = vmatpush1.msra.mxu0 %v193
  %216 = vmatprep.subr.mxu0 0.0
  %217 = vmatpush1.msra.mxu0 0.0
  %218 = vmatprep.subr.mxu0 0.0
  %219 = vmatpush1.msra.mxu0 0.0
  %220 = vmatprep.subr.mxu0 0.0
  %221 = vmatpush1.msra.mxu0 0.0
  %222 = vmatprep.subr.mxu0 0.0
  %223 = vmatpush1.msra.mxu0 0.0
  %224 = vmatprep.subr.mxu0 0.0
  %225 = vmatpush1.msra.mxu0 0.0
  %226 = vmatprep.subr.mxu0 0.0
  %227 = vmatpush1.msra.mxu0 0.0
  %228 = vmatprep.subr.mxu0 0.0
  %229 = vmatpush1.msra.mxu0 0.0
  %230 = vmatprep.subr.mxu0 0.0
  %231 = vmatpush1.msra.mxu0 0.0
  %232 = vmatprep.subr.mxu0 0.0
  %233 = vmatpush1.msra.mxu0 0.0
  %234 = vmatprep.subr.mxu0 0.0
  %235 = vmatpush1.msra.mxu0 0.0
  %236 = vmatprep.subr.mxu0 0.0
  %237 = vmatpush1.msra.mxu0 0.0
  %238 = vmatprep.subr.mxu0 0.0
  %239 = vmatpush1.msra.mxu0 0.0
  %240 = vmatprep.subr.mxu0 0.0
  %241 = vmatpush1.msra.mxu0 0.0
  %242 = vmatprep.subr.mxu0 0.0
  %243 = vmatpush1.msra.mxu0 0.0
  %244 = vmatprep.subr.mxu0 0.0
  %245 = vmatpush1.msra.mxu0 0.0
  %246 = vmatprep.subr.mxu0 0.0
  %247 = vmatpush1.msra.mxu0 0.0
  %248 = vmatprep.subr.mxu0 0.0
  %249 = vmatpush1.msra.mxu0 0.0
  %250 = vmatprep.subr.mxu0 0.0
  %251 = vmatpush1.msra.mxu0 0.0
  %252 = vmatprep.subr.mxu0 0.0
  %253 = vmatpush1.msra.mxu0 0.0
  %254 = vmatprep.subr.mxu0 0.0
  %255 = vmatpush1.msra.mxu0 0.0
  %256 = vmatprep.subr.mxu0 0.0
  %257 = vmatpush1.msra.mxu0 0.0
  %258 = vmatprep.subr.mxu0 0.0
  %259 = vmatpush1.msra.mxu0 0.0
  %260 = vmatprep.subr.mxu0 0.0
  %261 = vmatpush1.msra.mxu0 0.0
  %262 = vmatprep.subr.mxu0 0.0
  %263 = vmatpush1.msra.mxu0 0.0
  %264 = vmatprep.subr.mxu0 0.0
  %265 = vmatpush1.msra.mxu0 0.0
  %266 = vmatprep.subr.mxu0 0.0
  %267 = vmatpush1.msra.mxu0 0.0
  %268 = vmatprep.subr.mxu0 0.0
  %269 = vmatpush1.msra.mxu0 0.0
  %270 = vmatprep.subr.mxu0 0.0
  %271 = vmatpush1.msra.mxu0 0.0
  %272 = vmatprep.mubr.f32.mxu0 0.0
  %273 = vmatmul.mubr.f32.gmra.mrb[0].mxu0 %v206
  %v274 = vpop.f32.mrb[0].mxu0
  %v275 = vadd.f32 0.0, %v274
  %v276 = vpop.f32.mrb[0].mxu0
  %277 = vdwg.mxu0
  %v278 = vadd.f32 %v203, %v275
  %v279 = vxor.u32 %v278, 2147483648
  %v280 = vmul.f32 %v279, 1.442695
  %v281 = vpow.pop %v280
  %v282 = vadd.f32 %v281, 1.0
  %v283 = vrcp.pop %v282
  %v284 = vmul.f32 1.0, %v283
  %v285 = vtanh.pop %v278
  %v286 = vmul.f32 %v284, 0.0
  %288 = vrot.lane.b32.xlu0 %v285, 64
  %v289 = vpop.permute.xlu0 %288
  %v291 = vmul.f32 %v284, %v289
  %293 = vrot.lane.b32.xlu0 %v291, 32
  %v294 = vpop.permute.xlu0 %293
  %v296 = vadd.f32 %v286, %v294
  %v297 = vtanh.pop %v296
  %299 = vrot.lane.b32.xlu0 %v297, 64
  %v300 = vpop.permute.xlu0 %299
  %v302 = vmul.f32 %v284, %v300
  %304 = vrot.lane.b32.xlu0 %v302, 32
  %v305 = vpop.permute.xlu0 %304
  %v307 = vsel %vm204, %v305, 0.0
  %v309 = vlaneseq
  %v310 = vshrl.u32 %v309, 7
  %v311 = vsub.s32 0, %v310
  %v312 = vrot.slane %v202, %v311
  %vm314 = vcmask 523264
  %v316 = vsel %vm314, %v307, 0
  %318 = vmatprep.subr.mxu0 0.0
  %319 = vmatpush1.msra.mxu0 %v194
  %320 = vmatprep.subr.mxu0 0.0
  %321 = vmatpush1.msra.mxu0 %v195
  %322 = vmatprep.subr.mxu0 0.0
  %323 = vmatpush1.msra.mxu0 %v196
  %324 = vmatprep.subr.mxu0 0.0
  %325 = vmatpush1.msra.mxu0 %v197
  %326 = vmatprep.subr.mxu0 0.0
  %327 = vmatpush1.msra.mxu0 %v198
  %328 = vmatprep.subr.mxu0 0.0
  %329 = vmatpush1.msra.mxu0 %v199
  %330 = vmatprep.subr.mxu0 0.0
  %331 = vmatpush1.msra.mxu0 %v200
  %332 = vmatprep.subr.mxu0 0.0
  %333 = vmatpush1.msra.mxu0 %v201
  %334 = vmatprep.subr.mxu0 0.0
  %335 = vmatpush1.msra.mxu0 0.0
  %336 = vmatprep.subr.mxu0 0.0
  %337 = vmatpush1.msra.mxu0 0.0
  %338 = vmatprep.subr.mxu0 0.0
  %339 = vmatpush1.msra.mxu0 0.0
  %340 = vmatprep.subr.mxu0 0.0
  %341 = vmatpush1.msra.mxu0 0.0
  %342 = vmatprep.subr.mxu0 0.0
  %343 = vmatpush1.msra.mxu0 0.0
  %344 = vmatprep.subr.mxu0 0.0
  %345 = vmatpush1.msra.mxu0 0.0
  %346 = vmatprep.subr.mxu0 0.0
  %347 = vmatpush1.msra.mxu0 0.0
  %348 = vmatprep.subr.mxu0 0.0
  %349 = vmatpush1.msra.mxu0 0.0
  %350 = vmatprep.subr.mxu0 0.0
  %351 = vmatpush1.msra.mxu0 0.0
  %352 = vmatprep.subr.mxu0 0.0
  %353 = vmatpush1.msra.mxu0 0.0
  %354 = vmatprep.subr.mxu0 0.0
  %355 = vmatpush1.msra.mxu0 0.0
  %356 = vmatprep.subr.mxu0 0.0
  %357 = vmatpush1.msra.mxu0 0.0
  %358 = vmatprep.subr.mxu0 0.0
  %359 = vmatpush1.msra.mxu0 0.0
  %360 = vmatprep.subr.mxu0 0.0
  %361 = vmatpush1.msra.mxu0 0.0
  %362 = vmatprep.subr.mxu0 0.0
  %363 = vmatpush1.msra.mxu0 0.0
  %364 = vmatprep.subr.mxu0 0.0
  %365 = vmatpush1.msra.mxu0 0.0
  %366 = vmatprep.subr.mxu0 0.0
  %367 = vmatpush1.msra.mxu0 0.0
  %368 = vmatprep.subr.mxu0 0.0
  %369 = vmatpush1.msra.mxu0 0.0
  %370 = vmatprep.subr.mxu0 0.0
  %371 = vmatpush1.msra.mxu0 0.0
  %372 = vmatprep.subr.mxu0 0.0
  %373 = vmatpush1.msra.mxu0 0.0
  %374 = vmatprep.subr.mxu0 0.0
  %375 = vmatpush1.msra.mxu0 0.0
  %376 = vmatprep.subr.mxu0 0.0
  %377 = vmatpush1.msra.mxu0 0.0
  %378 = vmatprep.subr.mxu0 0.0
  %379 = vmatpush1.msra.mxu0 0.0
  %380 = vmatprep.subr.mxu0 0.0
  %381 = vmatpush1.msra.mxu0 0.0
  %382 = vmatprep.mubr.f32.mxu0 0.0
  %383 = vmatmul.mubr.f32.gmra.mrb[0].mxu0 %v316
  %v384 = vpop.f32.mrb[0].mxu0
  %v385 = vadd.f32 %v312, %v384
  %v386 = vpop.f32.mrb[0].mxu0
  %387 = vdwg.mxu0
  %v388 = vxor.u32 %v385, 2147483648
  %v389 = vmul.f32 %v388, 1.442695
  %v390 = vpow.pop %v389
  %v391 = vadd.f32 %v390, 1.0
  %v392 = vrcp.pop %v391
  %v393 = vmul.f32 1.0, %v392
  %v394 = vtanh.pop %v385
  %v395 = vmul.f32 %v393, 0.0
  %397 = vrot.lane.b32.xlu0 %v394, 64
  %v398 = vpop.permute.xlu0 %397
  %v400 = vmul.f32 %v393, %v398
  %402 = vrot.lane.b32.xlu0 %v400, 32
  %v403 = vpop.permute.xlu0 %402
  %v405 = vadd.f32 %v395, %v403
  %v406 = vtanh.pop %v405
  %408 = vrot.lane.b32.xlu0 %v406, 64
  %v409 = vpop.permute.xlu0 %408
  %v411 = vmul.f32 %v393, %v409
  %s412 = scalar_lea.vmem [#allocation2], 8
  %v413 = vld [vmem:[%s412] sm:$0xff]
  %v414 = vsel %vm204, %v305, 0
  %416 = vmatprep.subr.mxu0 0.0
  %417 = vmatpush1.msra.mxu0 %v190
  %418 = vmatprep.subr.mxu0 0.0
  %419 = vmatpush1.msra.mxu0 %v191
  %420 = vmatprep.subr.mxu0 0.0
  %421 = vmatpush1.msra.mxu0 %v192
  %422 = vmatprep.subr.mxu0 0.0
  %423 = vmatpush1.msra.mxu0 %v193
  %424 = vmatprep.subr.mxu0 0.0
  %425 = vmatpush1.msra.mxu0 0.0
  %426 = vmatprep.subr.mxu0 0.0
  %427 = vmatpush1.msra.mxu0 0.0
  %428 = vmatprep.subr.mxu0 0.0
  %429 = vmatpush1.msra.mxu0 0.0
  %430 = vmatprep.subr.mxu0 0.0
  %431 = vmatpush1.msra.mxu0 0.0
  %432 = vmatprep.subr.mxu0 0.0
  %433 = vmatpush1.msra.mxu0 0.0
  %434 = vmatprep.subr.mxu0 0.0
  %435 = vmatpush1.msra.mxu0 0.0
  %436 = vmatprep.subr.mxu0 0.0
  %437 = vmatpush1.msra.mxu0 0.0
  %438 = vmatprep.subr.mxu0 0.0
  %439 = vmatpush1.msra.mxu0 0.0
  %440 = vmatprep.subr.mxu0 0.0
  %441 = vmatpush1.msra.mxu0 0.0
  %442 = vmatprep.subr.mxu0 0.0
  %443 = vmatpush1.msra.mxu0 0.0
  %444 = vmatprep.subr.mxu0 0.0
  %445 = vmatpush1.msra.mxu0 0.0
  %446 = vmatprep.subr.mxu0 0.0
  %447 = vmatpush1.msra.mxu0 0.0
  %448 = vmatprep.subr.mxu0 0.0
  %449 = vmatpush1.msra.mxu0 0.0
  %450 = vmatprep.subr.mxu0 0.0
  %451 = vmatpush1.msra.mxu0 0.0
  %452 = vmatprep.subr.mxu0 0.0
  %453 = vmatpush1.msra.mxu0 0.0
  %454 = vmatprep.subr.mxu0 0.0
  %455 = vmatpush1.msra.mxu0 0.0
  %456 = vmatprep.subr.mxu0 0.0
  %457 = vmatpush1.msra.mxu0 0.0
  %458 = vmatprep.subr.mxu0 0.0
  %459 = vmatpush1.msra.mxu0 0.0
  %460 = vmatprep.subr.mxu0 0.0
  %461 = vmatpush1.msra.mxu0 0.0
  %462 = vmatprep.subr.mxu0 0.0
  %463 = vmatpush1.msra.mxu0 0.0
  %464 = vmatprep.subr.mxu0 0.0
  %465 = vmatpush1.msra.mxu0 0.0
  %466 = vmatprep.subr.mxu0 0.0
  %467 = vmatpush1.msra.mxu0 0.0
  %468 = vmatprep.subr.mxu0 0.0
  %469 = vmatpush1.msra.mxu0 0.0
  %470 = vmatprep.subr.mxu0 0.0
  %471 = vmatpush1.msra.mxu0 0.0
  %472 = vmatprep.subr.mxu0 0.0
  %473 = vmatpush1.msra.mxu0 0.0
  %474 = vmatprep.subr.mxu0 0.0
  %475 = vmatpush1.msra.mxu0 0.0
  %476 = vmatprep.subr.mxu0 0.0
  %477 = vmatpush1.msra.mxu0 0.0
  %478 = vmatprep.subr.mxu0 0.0
  %479 = vmatpush1.msra.mxu0 0.0
  %480 = vmatprep.mubr.f32.mxu0 0.0
  %481 = vmatmul.mubr.f32.gmra.mrb[0].mxu0 %v414
  %v482 = vpop.f32.mrb[0].mxu0
  %v483 = vadd.f32 0.0, %v482
  %v484 = vpop.f32.mrb[0].mxu0
  %485 = vdwg.mxu0
  %v486 = vadd.f32 %v413, %v483
  %v487 = vxor.u32 %v486, 2147483648
  %v488 = vmul.f32 %v487, 1.442695
  %v489 = vpow.pop %v488
  %v490 = vadd.f32 %v489, 1.0
  %v491 = vrcp.pop %v490
  %v492 = vmul.f32 1.0, %v491
  %v493 = vtanh.pop %v486
  %v494 = vmul.f32 %v492, %v296
  %496 = vrot.lane.b32.xlu0 %v493, 64
  %v497 = vpop.permute.xlu0 %496
  %v499 = vmul.f32 %v492, %v497
  %501 = vrot.lane.b32.xlu0 %v499, 32
  %v502 = vpop.permute.xlu0 %501
  %v504 = vadd.f32 %v494, %v502
  %v505 = vtanh.pop %v504
  %507 = vrot.lane.b32.xlu0 %v505, 64
  %v508 = vpop.permute.xlu0 %507
  %v510 = vmul.f32 %v492, %v508
  %512 = vrot.lane.b32.xlu0 %v510, 32
  %v513 = vpop.permute.xlu0 %512
  %516 = vrot.lane.b32.xlu0 %v411, 64
  %v517 = vpop.permute.xlu0 %516
  %v519 = vsel %vm204, %v513, %v517
  %v521 = vsel %vm314, %v519, 0
  %523 = vmatprep.subr.mxu0 0.0
  %524 = vmatpush1.msra.mxu0 %v194
  %525 = vmatprep.subr.mxu0 0.0
  %526 = vmatpush1.msra.mxu0 %v195
  %527 = vmatprep.subr.mxu0 0.0
  %528 = vmatpush1.msra.mxu0 %v196
  %529 = vmatprep.subr.mxu0 0.0
  %530 = vmatpush1.msra.mxu0 %v197
  %531 = vmatprep.subr.mxu0 0.0
  %532 = vmatpush1.msra.mxu0 %v198
  %533 = vmatprep.subr.mxu0 0.0
  %534 = vmatpush1.msra.mxu0 %v199
  %535 = vmatprep.subr.mxu0 0.0
  %536 = vmatpush1.msra.mxu0 %v200
  %537 = vmatprep.subr.mxu0 0.0
  %538 = vmatpush1.msra.mxu0 %v201
  %539 = vmatprep.subr.mxu0 0.0
  %540 = vmatpush1.msra.mxu0 0.0
  %541 = vmatprep.subr.mxu0 0.0
  %542 = vmatpush1.msra.mxu0 0.0
  %543 = vmatprep.subr.mxu0 0.0
  %544 = vmatpush1.msra.mxu0 0.0
  %545 = vmatprep.subr.mxu0 0.0
  %546 = vmatpush1.msra.mxu0 0.0
  %547 = vmatprep.subr.mxu0 0.0
  %548 = vmatpush1.msra.mxu0 0.0
  %549 = vmatprep.subr.mxu0 0.0
  %550 = vmatpush1.msra.mxu0 0.0
  %551 = vmatprep.subr.mxu0 0.0
  %552 = vmatpush1.msra.mxu0 0.0
  %553 = vmatprep.subr.mxu0 0.0
  %554 = vmatpush1.msra.mxu0 0.0
  %555 = vmatprep.subr.mxu0 0.0
  %556 = vmatpush1.msra.mxu0 0.0
  %557 = vmatprep.subr.mxu0 0.0
  %558 = vmatpush1.msra.mxu0 0.0
  %559 = vmatprep.subr.mxu0 0.0
  %560 = vmatpush1.msra.mxu0 0.0
  %561 = vmatprep.subr.mxu0 0.0
  %562 = vmatpush1.msra.mxu0 0.0
  %563 = vmatprep.subr.mxu0 0.0
  %564 = vmatpush1.msra.mxu0 0.0
  %565 = vmatprep.subr.mxu0 0.0
  %566 = vmatpush1.msra.mxu0 0.0
  %567 = vmatprep.subr.mxu0 0.0
  %568 = vmatpush1.msra.mxu0 0.0
  %569 = vmatprep.subr.mxu0 0.0
  %570 = vmatpush1.msra.mxu0 0.0
  %571 = vmatprep.subr.mxu0 0.0
  %572 = vmatpush1.msra.mxu0 0.0
  %573 = vmatprep.subr.mxu0 0.0
  %574 = vmatpush1.msra.mxu0 0.0
  %575 = vmatprep.subr.mxu0 0.0
  %576 = vmatpush1.msra.mxu0 0.0
  %577 = vmatprep.subr.mxu0 0.0
  %578 = vmatpush1.msra.mxu0 0.0
  %579 = vmatprep.subr.mxu0 0.0
  %580 = vmatpush1.msra.mxu0 0.0
  %581 = vmatprep.subr.mxu0 0.0
  %582 = vmatpush1.msra.mxu0 0.0
  %583 = vmatprep.subr.mxu0 0.0
  %584 = vmatpush1.msra.mxu0 0.0
  %585 = vmatprep.subr.mxu0 0.0
  %586 = vmatpush1.msra.mxu0 0.0
  %587 = vmatprep.mubr.f32.mxu0 0.0
  %588 = vmatmul.mubr.f32.gmra.mrb[0].mxu0 %v521
  %v589 = vpop.f32.mrb[0].mxu0
  %v590 = vadd.f32 %v312, %v589
  %v591 = vpop.f32.mrb[0].mxu0
  %592 = vdwg.mxu0
  %v593 = vxor.u32 %v590, 2147483648
  %v594 = vmul.f32 %v593, 1.442695
  %v595 = vpow.pop %v594
  %v596 = vadd.f32 %v595, 1.0
  %v597 = vrcp.pop %v596
  %v598 = vmul.f32 1.0, %v597
  %v599 = vtanh.pop %v590
  %v600 = vmul.f32 %v598, %v405
  %602 = vrot.lane.b32.xlu0 %v599, 64
  %v603 = vpop.permute.xlu0 %602
  %v605 = vmul.f32 %v598, %v603
  %607 = vrot.lane.b32.xlu0 %v605, 32
  %v608 = vpop.permute.xlu0 %607
  %v610 = vadd.f32 %v600, %v608
  %v611 = vtanh.pop %v610
  %613 = vrot.lane.b32.xlu0 %v611, 64
  %v614 = vpop.permute.xlu0 %613
  %v616 = vmul.f32 %v598, %v614
  %s617 = scalar_lea.vmem [#allocation2], 16
  %v618 = vld [vmem:[%s617] sm:$0xff]
  %v619 = vsel %vm204, %v513, 0
  %621 = vmatprep.subr.mxu0 0.0
  %622 = vmatpush1.msra.mxu0 %v190
  %623 = vmatprep.subr.mxu0 0.0
  %624 = vmatpush1.msra.mxu0 %v191
  %625 = vmatprep.subr.mxu0 0.0
  %626 = vmatpush1.msra.mxu0 %v192
  %627 = vmatprep.subr.mxu0 0.0
  %628 = vmatpush1.msra.mxu0 %v193
  %629 = vmatprep.subr.mxu0 0.0
  %630 = vmatpush1.msra.mxu0 0.0
  %631 = vmatprep.subr.mxu0 0.0
  %632 = vmatpush1.msra.mxu0 0.0
  %633 = vmatprep.subr.mxu0 0.0
  %634 = vmatpush1.msra.mxu0 0.0
  %635 = vmatprep.subr.mxu0 0.0
  %636 = vmatpush1.msra.mxu0 0.0
  %637 = vmatprep.subr.mxu0 0.0
  %638 = vmatpush1.msra.mxu0 0.0
  %639 = vmatprep.subr.mxu0 0.0
  %640 = vmatpush1.msra.mxu0 0.0
  %641 = vmatprep.subr.mxu0 0.0
  %642 = vmatpush1.msra.mxu0 0.0
  %643 = vmatprep.subr.mxu0 0.0
  %644 = vmatpush1.msra.mxu0 0.0
  %645 = vmatprep.subr.mxu0 0.0
  %646 = vmatpush1.msra.mxu0 0.0
  %647 = vmatprep.subr.mxu0 0.0
  %648 = vmatpush1.msra.mxu0 0.0
  %649 = vmatprep.subr.mxu0 0.0
  %650 = vmatpush1.msra.mxu0 0.0
  %651 = vmatprep.subr.mxu0 0.0
  %652 = vmatpush1.msra.mxu0 0.0
  %653 = vmatprep.subr.mxu0 0.0
  %654 = vmatpush1.msra.mxu0 0.0
  %655 = vmatprep.subr.mxu0 0.0
  %656 = vmatpush1.msra.mxu0 0.0
  %657 = vmatprep.subr.mxu0 0.0
  %658 = vmatpush1.msra.mxu0 0.0
  %659 = vmatprep.subr.mxu0 0.0
  %660 = vmatpush1.msra.mxu0 0.0
  %661 = vmatprep.subr.mxu0 0.0
  %662 = vmatpush1.msra.mxu0 0.0
  %663 = vmatprep.subr.mxu0 0.0
  %664 = vmatpush1.msra.mxu0 0.0
  %665 = vmatprep.subr.mxu0 0.0
  %666 = vmatpush1.msra.mxu0 0.0
  %667 = vmatprep.subr.mxu0 0.0
  %668 = vmatpush1.msra.mxu0 0.0
  %669 = vmatprep.subr.mxu0 0.0
  %670 = vmatpush1.msra.mxu0 0.0
  %671 = vmatprep.subr.mxu0 0.0
  %672 = vmatpush1.msra.mxu0 0.0
  %673 = vmatprep.subr.mxu0 0.0
  %674 = vmatpush1.msra.mxu0 0.0
  %675 = vmatprep.subr.mxu0 0.0
  %676 = vmatpush1.msra.mxu0 0.0
  %677 = vmatprep.subr.mxu0 0.0
  %678 = vmatpush1.msra.mxu0 0.0
  %679 = vmatprep.subr.mxu0 0.0
  %680 = vmatpush1.msra.mxu0 0.0
  %681 = vmatprep.subr.mxu0 0.0
  %682 = vmatpush1.msra.mxu0 0.0
  %683 = vmatprep.subr.mxu0 0.0
  %684 = vmatpush1.msra.mxu0 0.0
  %685 = vmatprep.mubr.f32.mxu0 0.0
  %686 = vmatmul.mubr.f32.gmra.mrb[0].mxu0 %v619
  %v687 = vpop.f32.mrb[0].mxu0
  %v688 = vadd.f32 0.0, %v687
  %v689 = vpop.f32.mrb[0].mxu0
  %690 = vdwg.mxu0
  %v691 = vadd.f32 %v618, %v688
  %v692 = vxor.u32 %v691, 2147483648
  %v693 = vmul.f32 %v692, 1.442695
  %v694 = vpow.pop %v693
  %v695 = vadd.f32 %v694, 1.0
  %v696 = vrcp.pop %v695
  %v697 = vmul.f32 1.0, %v696
  %v698 = vtanh.pop %v691
  %v699 = vmul.f32 %v697, %v504
  %701 = vrot.lane.b32.xlu0 %v698, 64
  %v702 = vpop.permute.xlu0 %701
  %v704 = vmul.f32 %v697, %v702
  %706 = vrot.lane.b32.xlu0 %v704, 32
  %v707 = vpop.permute.xlu0 %706
  %v709 = vadd.f32 %v699, %v707
  %v710 = vtanh.pop %v709
  %712 = vrot.lane.b32.xlu0 %v710, 64
  %v713 = vpop.permute.xlu0 %712
  %v715 = vmul.f32 %v697, %v713
  %717 = vrot.lane.b32.xlu0 %v715, 32
  %v718 = vpop.permute.xlu0 %717
  %721 = vrot.lane.b32.xlu0 %v616, 64
  %v722 = vpop.permute.xlu0 %721
  %v724 = vsel %vm204, %v718, %v722
  %v726 = vsel %vm314, %v724, 0
  %728 = vmatprep.subr.mxu0 0.0
  %729 = vmatpush1.msra.mxu0 %v194
  %730 = vmatprep.subr.mxu0 0.0
  %731 = vmatpush1.msra.mxu0 %v195
  %732 = vmatprep.subr.mxu0 0.0
  %733 = vmatpush1.msra.mxu0 %v196
  %734 = vmatprep.subr.mxu0 0.0
  %735 = vmatpush1.msra.mxu0 %v197
  %736 = vmatprep.subr.mxu0 0.0
  %737 = vmatpush1.msra.mxu0 %v198
  %738 = vmatprep.subr.mxu0 0.0
  %739 = vmatpush1.msra.mxu0 %v199
  %740 = vmatprep.subr.mxu0 0.0
  %741 = vmatpush1.msra.mxu0 %v200
  %742 = vmatprep.subr.mxu0 0.0
  %743 = vmatpush1.msra.mxu0 %v201
  %744 = vmatprep.subr.mxu0 0.0
  %745 = vmatpush1.msra.mxu0 0.0
  %746 = vmatprep.subr.mxu0 0.0
  %747 = vmatpush1.msra.mxu0 0.0
  %748 = vmatprep.subr.mxu0 0.0
  %749 = vmatpush1.msra.mxu0 0.0
  %750 = vmatprep.subr.mxu0 0.0
  %751 = vmatpush1.msra.mxu0 0.0
  %752 = vmatprep.subr.mxu0 0.0
  %753 = vmatpush1.msra.mxu0 0.0
  %754 = vmatprep.subr.mxu0 0.0
  %755 = vmatpush1.msra.mxu0 0.0
  %756 = vmatprep.subr.mxu0 0.0
  %757 = vmatpush1.msra.mxu0 0.0
  %758 = vmatprep.subr.mxu0 0.0
  %759 = vmatpush1.msra.mxu0 0.0
  %760 = vmatprep.subr.mxu0 0.0
  %761 = vmatpush1.msra.mxu0 0.0
  %762 = vmatprep.subr.mxu0 0.0
  %763 = vmatpush1.msra.mxu0 0.0
  %764 = vmatprep.subr.mxu0 0.0
  %765 = vmatpush1.msra.mxu0 0.0
  %766 = vmatprep.subr.mxu0 0.0
  %767 = vmatpush1.msra.mxu0 0.0
  %768 = vmatprep.subr.mxu0 0.0
  %769 = vmatpush1.msra.mxu0 0.0
  %770 = vmatprep.subr.mxu0 0.0
  %771 = vmatpush1.msra.mxu0 0.0
  %772 = vmatprep.subr.mxu0 0.0
  %773 = vmatpush1.msra.mxu0 0.0
  %774 = vmatprep.subr.mxu0 0.0
  %775 = vmatpush1.msra.mxu0 0.0
  %776 = vmatprep.subr.mxu0 0.0
  %777 = vmatpush1.msra.mxu0 0.0
  %778 = vmatprep.subr.mxu0 0.0
  %779 = vmatpush1.msra.mxu0 0.0
  %780 = vmatprep.subr.mxu0 0.0
  %781 = vmatpush1.msra.mxu0 0.0
  %782 = vmatprep.subr.mxu0 0.0
  %783 = vmatpush1.msra.mxu0 0.0
  %784 = vmatprep.subr.mxu0 0.0
  %785 = vmatpush1.msra.mxu0 0.0
  %786 = vmatprep.subr.mxu0 0.0
  %787 = vmatpush1.msra.mxu0 0.0
  %788 = vmatprep.subr.mxu0 0.0
  %789 = vmatpush1.msra.mxu0 0.0
  %790 = vmatprep.subr.mxu0 0.0
  %791 = vmatpush1.msra.mxu0 0.0
  %792 = vmatprep.mubr.f32.mxu0 0.0
  %793 = vmatmul.mubr.f32.gmra.mrb[0].mxu0 %v726
  %v794 = vpop.f32.mrb[0].mxu0
  %v795 = vadd.f32 %v312, %v794
  %v796 = vpop.f32.mrb[0].mxu0
  %797 = vdwg.mxu0
  %v798 = vxor.u32 %v795, 2147483648
  %v799 = vmul.f32 %v798, 1.442695
  %v800 = vpow.pop %v799
  %v801 = vadd.f32 %v800, 1.0
  %v802 = vrcp.pop %v801
  %v803 = vmul.f32 1.0, %v802
  %v804 = vtanh.pop %v795
  %v805 = vmul.f32 %v803, %v610
  %807 = vrot.lane.b32.xlu0 %v804, 64
  %v808 = vpop.permute.xlu0 %807
  %v810 = vmul.f32 %v803, %v808
  %812 = vrot.lane.b32.xlu0 %v810, 32
  %v813 = vpop.permute.xlu0 %812
  %v815 = vadd.f32 %v805, %v813
  %v816 = vtanh.pop %v815
  %818 = vrot.lane.b32.xlu0 %v816, 64
  %v819 = vpop.permute.xlu0 %818
  %v821 = vmul.f32 %v803, %v819
  %s822 = scalar_lea.vmem [#allocation2], 24
  %v823 = vld [vmem:[%s822] sm:$0xff]
  %v824 = vsel %vm204, %v718, 0
  %826 = vmatprep.subr.mxu0 0.0
  %827 = vmatpush1.msra.mxu0 %v190
  %828 = vmatprep.subr.mxu0 0.0
  %829 = vmatpush1.msra.mxu0 %v191
  %830 = vmatprep.subr.mxu0 0.0
  %831 = vmatpush1.msra.mxu0 %v192
  %832 = vmatprep.subr.mxu0 0.0
  %833 = vmatpush1.msra.mxu0 %v193
  %834 = vmatprep.subr.mxu0 0.0
  %835 = vmatpush1.msra.mxu0 0.0
  %836 = vmatprep.subr.mxu0 0.0
  %837 = vmatpush1.msra.mxu0 0.0
  %838 = vmatprep.subr.mxu0 0.0
  %839 = vmatpush1.msra.mxu0 0.0
  %840 = vmatprep.subr.mxu0 0.0
  %841 = vmatpush1.msra.mxu0 0.0
  %842 = vmatprep.subr.mxu0 0.0
  %843 = vmatpush1.msra.mxu0 0.0
  %844 = vmatprep.subr.mxu0 0.0
  %845 = vmatpush1.msra.mxu0 0.0
  %846 = vmatprep.subr.mxu0 0.0
  %847 = vmatpush1.msra.mxu0 0.0
  %848 = vmatprep.subr.mxu0 0.0
  %849 = vmatpush1.msra.mxu0 0.0
  %850 = vmatprep.subr.mxu0 0.0
  %851 = vmatpush1.msra.mxu0 0.0
  %852 = vmatprep.subr.mxu0 0.0
  %853 = vmatpush1.msra.mxu0 0.0
  %854 = vmatprep.subr.mxu0 0.0
  %855 = vmatpush1.msra.mxu0 0.0
  %856 = vmatprep.subr.mxu0 0.0
  %857 = vmatpush1.msra.mxu0 0.0
  %858 = vmatprep.subr.mxu0 0.0
  %859 = vmatpush1.msra.mxu0 0.0
  %860 = vmatprep.subr.mxu0 0.0
  %861 = vmatpush1.msra.mxu0 0.0
  %862 = vmatprep.subr.mxu0 0.0
  %863 = vmatpush1.msra.mxu0 0.0
  %864 = vmatprep.subr.mxu0 0.0
  %865 = vmatpush1.msra.mxu0 0.0
  %866 = vmatprep.subr.mxu0 0.0
  %867 = vmatpush1.msra.mxu0 0.0
  %868 = vmatprep.subr.mxu0 0.0
  %869 = vmatpush1.msra.mxu0 0.0
  %870 = vmatprep.subr.mxu0 0.0
  %871 = vmatpush1.msra.mxu0 0.0
  %872 = vmatprep.subr.mxu0 0.0
  %873 = vmatpush1.msra.mxu0 0.0
  %874 = vmatprep.subr.mxu0 0.0
  %875 = vmatpush1.msra.mxu0 0.0
  %876 = vmatprep.subr.mxu0 0.0
  %877 = vmatpush1.msra.mxu0 0.0
  %878 = vmatprep.subr.mxu0 0.0
  %879 = vmatpush1.msra.mxu0 0.0
  %880 = vmatprep.subr.mxu0 0.0
  %881 = vmatpush1.msra.mxu0 0.0
  %882 = vmatprep.subr.mxu0 0.0
  %883 = vmatpush1.msra.mxu0 0.0
  %884 = vmatprep.subr.mxu0 0.0
  %885 = vmatpush1.msra.mxu0 0.0
  %886 = vmatprep.subr.mxu0 0.0
  %887 = vmatpush1.msra.mxu0 0.0
  %888 = vmatprep.subr.mxu0 0.0
  %889 = vmatpush1.msra.mxu0 0.0
  %890 = vmatprep.mubr.f32.mxu0 0.0
  %891 = vmatmul.mubr.f32.gmra.mrb[0].mxu0 %v824
  %v892 = vpop.f32.mrb[0].mxu0
  %v893 = vadd.f32 0.0, %v892
  %v894 = vpop.f32.mrb[0].mxu0
  %895 = vdwg.mxu0
  %v896 = vadd.f32 %v823, %v893
  %v897 = vxor.u32 %v896, 2147483648
  %v898 = vmul.f32 %v897, 1.442695
  %v899 = vpow.pop %v898
  %v900 = vadd.f32 %v899, 1.0
  %v901 = vrcp.pop %v900
  %v902 = vmul.f32 1.0, %v901
  %v903 = vtanh.pop %v896
  %v904 = vmul.f32 %v902, %v709
  %906 = vrot.lane.b32.xlu0 %v903, 64
  %v907 = vpop.permute.xlu0 %906
  %v909 = vmul.f32 %v902, %v907
  %911 = vrot.lane.b32.xlu0 %v909, 32
  %v912 = vpop.permute.xlu0 %911
  %v914 = vadd.f32 %v904, %v912
  %v915 = vtanh.pop %v914
  %917 = vrot.lane.b32.xlu0 %v915, 64
  %v918 = vpop.permute.xlu0 %917
  %v920 = vmul.f32 %v902, %v918
  %922 = vrot.lane.b32.xlu0 %v920, 32
  %v923 = vpop.permute.xlu0 %922
  %926 = vrot.lane.b32.xlu0 %v821, 64
  %v927 = vpop.permute.xlu0 %926
  %v929 = vsel %vm204, %v923, %v927
  %v931 = vsel %vm314, %v929, 0
  %933 = vmatprep.subr.mxu0 0.0
  %934 = vmatpush1.msra.mxu0 %v194
  %935 = vmatprep.subr.mxu0 0.0
  %936 = vmatpush1.msra.mxu0 %v195
  %937 = vmatprep.subr.mxu0 0.0
  %938 = vmatpush1.msra.mxu0 %v196
  %939 = vmatprep.subr.mxu0 0.0
  %940 = vmatpush1.msra.mxu0 %v197
  %941 = vmatprep.subr.mxu0 0.0
  %942 = vmatpush1.msra.mxu0 %v198
  %943 = vmatprep.subr.mxu0 0.0
  %944 = vmatpush1.msra.mxu0 %v199
  %945 = vmatprep.subr.mxu0 0.0
  %946 = vmatpush1.msra.mxu0 %v200
  %947 = vmatprep.subr.mxu0 0.0
  %948 = vmatpush1.msra.mxu0 %v201
  %949 = vmatprep.subr.mxu0 0.0
  %950 = vmatpush1.msra.mxu0 0.0
  %951 = vmatprep.subr.mxu0 0.0
  %952 = vmatpush1.msra.mxu0 0.0
  %953 = vmatprep.subr.mxu0 0.0
  %954 = vmatpush1.msra.mxu0 0.0
  %955 = vmatprep.subr.mxu0 0.0
  %956 = vmatpush1.msra.mxu0 0.0
  %957 = vmatprep.subr.mxu0 0.0
  %958 = vmatpush1.msra.mxu0 0.0
  %959 = vmatprep.subr.mxu0 0.0
  %960 = vmatpush1.msra.mxu0 0.0
  %961 = vmatprep.subr.mxu0 0.0
  %962 = vmatpush1.msra.mxu0 0.0
  %963 = vmatprep.subr.mxu0 0.0
  %964 = vmatpush1.msra.mxu0 0.0
  %965 = vmatprep.subr.mxu0 0.0
  %966 = vmatpush1.msra.mxu0 0.0
  %967 = vmatprep.subr.mxu0 0.0
  %968 = vmatpush1.msra.mxu0 0.0
  %969 = vmatprep.subr.mxu0 0.0
  %970 = vmatpush1.msra.mxu0 0.0
  %971 = vmatprep.subr.mxu0 0.0
  %972 = vmatpush1.msra.mxu0 0.0
  %973 = vmatprep.subr.mxu0 0.0
  %974 = vmatpush1.msra.mxu0 0.0
  %975 = vmatprep.subr.mxu0 0.0
  %976 = vmatpush1.msra.mxu0 0.0
  %977 = vmatprep.subr.mxu0 0.0
  %978 = vmatpush1.msra.mxu0 0.0
  %979 = vmatprep.subr.mxu0 0.0
  %980 = vmatpush1.msra.mxu0 0.0
  %981 = vmatprep.subr.mxu0 0.0
  %982 = vmatpush1.msra.mxu0 0.0
  %983 = vmatprep.subr.mxu0 0.0
  %984 = vmatpush1.msra.mxu0 0.0
  %985 = vmatprep.subr.mxu0 0.0
  %986 = vmatpush1.msra.mxu0 0.0
  %987 = vmatprep.subr.mxu0 0.0
  %988 = vmatpush1.msra.mxu0 0.0
  %989 = vmatprep.subr.mxu0 0.0
  %990 = vmatpush1.msra.mxu0 0.0
  %991 = vmatprep.subr.mxu0 0.0
  %992 = vmatpush1.msra.mxu0 0.0
  %993 = vmatprep.subr.mxu0 0.0
  %994 = vmatpush1.msra.mxu0 0.0
  %995 = vmatprep.subr.mxu0 0.0
  %996 = vmatpush1.msra.mxu0 0.0
  %997 = vmatprep.mubr.f32.mxu0 0.0
  %998 = vmatmul.mubr.f32.gmra.mrb[0].mxu0 %v931
  %v999 = vpop.f32.mrb[0].mxu0
  %v1000 = vadd.f32 %v312, %v999
  %v1001 = vpop.f32.mrb[0].mxu0
  %1002 = vdwg.mxu0
  %v1003 = vxor.u32 %v1000, 2147483648
  %v1004 = vmul.f32 %v1003, 1.442695
  %v1005 = vpow.pop %v1004
  %v1006 = vadd.f32 %v1005, 1.0
  %v1007 = vrcp.pop %v1006
  %v1008 = vmul.f32 1.0, %v1007
  %v1009 = vtanh.pop %v1000
  %v1010 = vmul.f32 %v1008, %v815
  %1012 = vrot.lane.b32.xlu0 %v1009, 64
  %v1013 = vpop.permute.xlu0 %1012
  %v1015 = vmul.f32 %v1008, %v1013
  %1017 = vrot.lane.b32.xlu0 %v1015, 32
  %v1018 = vpop.permute.xlu0 %1017
  %v1020 = vadd.f32 %v1010, %v1018
  %v1021 = vtanh.pop %v1020
  %1023 = vrot.lane.b32.xlu0 %v1021, 64
  %v1024 = vpop.permute.xlu0 %1023
  %v1026 = vmul.f32 %v1008, %v1024
  %s1027 = scalar_lea.vmem [#allocation2], 32
  %v1028 = vld [vmem:[%s1027] sm:$0xff]
  %v1029 = vsel %vm204, %v923, 0
  %1031 = vmatprep.subr.mxu0 0.0
  %1032 = vmatpush1.msra.mxu0 %v190
  %1033 = vmatprep.subr.mxu0 0.0
  %1034 = vmatpush1.msra.mxu0 %v191
  %1035 = vmatprep.subr.mxu0 0.0
  %1036 = vmatpush1.msra.mxu0 %v192
  %1037 = vmatprep.subr.mxu0 0.0
  %1038 = vmatpush1.msra.mxu0 %v193
  %1039 = vmatprep.subr.mxu0 0.0
  %1040 = vmatpush1.msra.mxu0 0.0
  %1041 = vmatprep.subr.mxu0 0.0
  %1042 = vmatpush1.msra.mxu0 0.0
  %1043 = vmatprep.subr.mxu0 0.0
  %1044 = vmatpush1.msra.mxu0 0.0
  %1045 = vmatprep.subr.mxu0 0.0
  %1046 = vmatpush1.msra.mxu0 0.0
  %1047 = vmatprep.subr.mxu0 0.0
  %1048 = vmatpush1.msra.mxu0 0.0
  %1049 = vmatprep.subr.mxu0 0.0
  %1050 = vmatpush1.msra.mxu0 0.0
  %1051 = vmatprep.subr.mxu0 0.0
  %1052 = vmatpush1.msra.mxu0 0.0
  %1053 = vmatprep.subr.mxu0 0.0
  %1054 = vmatpush1.msra.mxu0 0.0
  %1055 = vmatprep.subr.mxu0 0.0
  %1056 = vmatpush1.msra.mxu0 0.0
  %1057 = vmatprep.subr.mxu0 0.0
  %1058 = vmatpush1.msra.mxu0 0.0
  %1059 = vmatprep.subr.mxu0 0.0
  %1060 = vmatpush1.msra.mxu0 0.0
  %1061 = vmatprep.subr.mxu0 0.0
  %1062 = vmatpush1.msra.mxu0 0.0
  %1063 = vmatprep.subr.mxu0 0.0
  %1064 = vmatpush1.msra.mxu0 0.0
  %1065 = vmatprep.subr.mxu0 0.0
  %1066 = vmatpush1.msra.mxu0 0.0
  %1067 = vmatprep.subr.mxu0 0.0
  %1068 = vmatpush1.msra.mxu0 0.0
  %1069 = vmatprep.subr.mxu0 0.0
  %1070 = vmatpush1.msra.mxu0 0.0
  %1071 = vmatprep.subr.mxu0 0.0
  %1072 = vmatpush1.msra.mxu0 0.0
  %1073 = vmatprep.subr.mxu0 0.0
  %1074 = vmatpush1.msra.mxu0 0.0
  %1075 = vmatprep.subr.mxu0 0.0
  %1076 = vmatpush1.msra.mxu0 0.0
  %1077 = vmatprep.subr.mxu0 0.0
  %1078 = vmatpush1.msra.mxu0 0.0
  %1079 = vmatprep.subr.mxu0 0.0
  %1080 = vmatpush1.msra.mxu0 0.0
  %1081 = vmatprep.subr.mxu0 0.0
  %1082 = vmatpush1.msra.mxu0 0.0
  %1083 = vmatprep.subr.mxu0 0.0
  %1084 = vmatpush1.msra.mxu0 0.0
  %1085 = vmatprep.subr.mxu0 0.0
  %1086 = vmatpush1.msra.mxu0 0.0
  %1087 = vmatprep.subr.mxu0 0.0
  %1088 = vmatpush1.msra.mxu0 0.0
  %1089 = vmatprep.subr.mxu0 0.0
  %1090 = vmatpush1.msra.mxu0 0.0
  %1091 = vmatprep.subr.mxu0 0.0
  %1092 = vmatpush1.msra.mxu0 0.0
  %1093 = vmatprep.subr.mxu0 0.0
  %1094 = vmatpush1.msra.mxu0 0.0
  %1095 = vmatprep.mubr.f32.mxu0 0.0
  %1096 = vmatmul.mubr.f32.gmra.mrb[0].mxu0 %v1029
  %v1097 = vpop.f32.mrb[0].mxu0
  %v1098 = vadd.f32 0.0, %v1097
  %v1099 = vpop.f32.mrb[0].mxu0
  %1100 = vdwg.mxu0
  %v1101 = vadd.f32 %v1028, %v1098
  %v1102 = vxor.u32 %v1101, 2147483648
  %v1103 = vmul.f32 %v1102, 1.442695
  %v1104 = vpow.pop %v1103
  %v1105 = vadd.f32 %v1104, 1.0
  %v1106 = vrcp.pop %v1105
  %v1107 = vmul.f32 1.0, %v1106
  %v1108 = vtanh.pop %v1101
  %v1109 = vmul.f32 %v1107, %v914
  %1111 = vrot.lane.b32.xlu0 %v1108, 64
  %v1112 = vpop.permute.xlu0 %1111
  %v1114 = vmul.f32 %v1107, %v1112
  %1116 = vrot.lane.b32.xlu0 %v1114, 32
  %v1117 = vpop.permute.xlu0 %1116
  %v1119 = vadd.f32 %v1109, %v1117
  %v1120 = vtanh.pop %v1119
  %1122 = vrot.lane.b32.xlu0 %v1120, 64
  %v1123 = vpop.permute.xlu0 %1122
  %v1125 = vmul.f32 %v1107, %v1123
  %1127 = vrot.lane.b32.xlu0 %v1125, 32
  %v1128 = vpop.permute.xlu0 %1127
  %1131 = vrot.lane.b32.xlu0 %v1026, 64
  %v1132 = vpop.permute.xlu0 %1131
  %v1134 = vsel %vm204, %v1128, %v1132
  %v1136 = vsel %vm314, %v1134, 0
  %1138 = vmatprep.subr.mxu0 0.0
  %1139 = vmatpush1.msra.mxu0 %v194
  %1140 = vmatprep.subr.mxu0 0.0
  %1141 = vmatpush1.msra.mxu0 %v195
  %1142 = vmatprep.subr.mxu0 0.0
  %1143 = vmatpush1.msra.mxu0 %v196
  %1144 = vmatprep.subr.mxu0 0.0
  %1145 = vmatpush1.msra.mxu0 %v197
  %1146 = vmatprep.subr.mxu0 0.0
  %1147 = vmatpush1.msra.mxu0 %v198
  %1148 = vmatprep.subr.mxu0 0.0
  %1149 = vmatpush1.msra.mxu0 %v199
  %1150 = vmatprep.subr.mxu0 0.0
  %1151 = vmatpush1.msra.mxu0 %v200
  %1152 = vmatprep.subr.mxu0 0.0
  %1153 = vmatpush1.msra.mxu0 %v201
  %1154 = vmatprep.subr.mxu0 0.0
  %1155 = vmatpush1.msra.mxu0 0.0
  %1156 = vmatprep.subr.mxu0 0.0
  %1157 = vmatpush1.msra.mxu0 0.0
  %1158 = vmatprep.subr.mxu0 0.0
  %1159 = vmatpush1.msra.mxu0 0.0
  %1160 = vmatprep.subr.mxu0 0.0
  %1161 = vmatpush1.msra.mxu0 0.0
  %1162 = vmatprep.subr.mxu0 0.0
  %1163 = vmatpush1.msra.mxu0 0.0
  %1164 = vmatprep.subr.mxu0 0.0
  %1165 = vmatpush1.msra.mxu0 0.0
  %1166 = vmatprep.subr.mxu0 0.0
  %1167 = vmatpush1.msra.mxu0 0.0
  %1168 = vmatprep.subr.mxu0 0.0
  %1169 = vmatpush1.msra.mxu0 0.0
  %1170 = vmatprep.subr.mxu0 0.0
  %1171 = vmatpush1.msra.mxu0 0.0
  %1172 = vmatprep.subr.mxu0 0.0
  %1173 = vmatpush1.msra.mxu0 0.0
  %1174 = vmatprep.subr.mxu0 0.0
  %1175 = vmatpush1.msra.mxu0 0.0
  %1176 = vmatprep.subr.mxu0 0.0
  %1177 = vmatpush1.msra.mxu0 0.0
  %1178 = vmatprep.subr.mxu0 0.0
  %1179 = vmatpush1.msra.mxu0 0.0
  %1180 = vmatprep.subr.mxu0 0.0
  %1181 = vmatpush1.msra.mxu0 0.0
  %1182 = vmatprep.subr.mxu0 0.0
  %1183 = vmatpush1.msra.mxu0 0.0
  %1184 = vmatprep.subr.mxu0 0.0
  %1185 = vmatpush1.msra.mxu0 0.0
  %1186 = vmatprep.subr.mxu0 0.0
  %1187 = vmatpush1.msra.mxu0 0.0
  %1188 = vmatprep.subr.mxu0 0.0
  %1189 = vmatpush1.msra.mxu0 0.0
  %1190 = vmatprep.subr.mxu0 0.0
  %1191 = vmatpush1.msra.mxu0 0.0
  %1192 = vmatprep.subr.mxu0 0.0
  %1193 = vmatpush1.msra.mxu0 0.0
  %1194 = vmatprep.subr.mxu0 0.0
  %1195 = vmatpush1.msra.mxu0 0.0
  %1196 = vmatprep.subr.mxu0 0.0
  %1197 = vmatpush1.msra.mxu0 0.0
  %1198 = vmatprep.subr.mxu0 0.0
  %1199 = vmatpush1.msra.mxu0 0.0
  %1200 = vmatprep.subr.mxu0 0.0
  %1201 = vmatpush1.msra.mxu0 0.0
  %1202 = vmatprep.mubr.f32.mxu0 0.0
  %1203 = vmatmul.mubr.f32.gmra.mrb[0].mxu0 %v1136
  %v1204 = vpop.f32.mrb[0].mxu0
  %v1205 = vadd.f32 %v312, %v1204
  %v1206 = vpop.f32.mrb[0].mxu0
  %1207 = vdwg.mxu0
  %v1208 = vxor.u32 %v1205, 2147483648
  %v1209 = vmul.f32 %v1208, 1.442695
  %v1210 = vpow.pop %v1209
  %v1211 = vadd.f32 %v1210, 1.0
  %v1212 = vrcp.pop %v1211
  %v1213 = vmul.f32 1.0, %v1212
  %v1214 = vtanh.pop %v1205
  %v1215 = vmul.f32 %v1213, %v1020
  %1217 = vrot.lane.b32.xlu0 %v1214, 64
  %v1218 = vpop.permute.xlu0 %1217
  %v1220 = vmul.f32 %v1213, %v1218
  %1222 = vrot.lane.b32.xlu0 %v1220, 32
  %v1223 = vpop.permute.xlu0 %1222
  %v1225 = vadd.f32 %v1215, %v1223
  %v1226 = vtanh.pop %v1225
  %1228 = vrot.lane.b32.xlu0 %v1226, 64
  %v1229 = vpop.permute.xlu0 %1228
  %v1231 = vmul.f32 %v1213, %v1229
  %s1232 = scalar_lea.vmem [#allocation2], 40
  %v1233 = vld [vmem:[%s1232] sm:$0xff]
  %v1234 = vsel %vm204, %v1128, 0
  %1236 = vmatprep.subr.mxu0 0.0
  %1237 = vmatpush1.msra.mxu0 %v190
  %1238 = vmatprep.subr.mxu0 0.0
  %1239 = vmatpush1.msra.mxu0 %v191
  %1240 = vmatprep.subr.mxu0 0.0
  %1241 = vmatpush1.msra.mxu0 %v192
  %1242 = vmatprep.subr.mxu0 0.0
  %1243 = vmatpush1.msra.mxu0 %v193
  %1244 = vmatprep.subr.mxu0 0.0
  %1245 = vmatpush1.msra.mxu0 0.0
  %1246 = vmatprep.subr.mxu0 0.0
  %1247 = vmatpush1.msra.mxu0 0.0
  %1248 = vmatprep.subr.mxu0 0.0
  %1249 = vmatpush1.msra.mxu0 0.0
  %1250 = vmatprep.subr.mxu0 0.0
  %1251 = vmatpush1.msra.mxu0 0.0
  %1252 = vmatprep.subr.mxu0 0.0
  %1253 = vmatpush1.msra.mxu0 0.0
  %1254 = vmatprep.subr.mxu0 0.0
  %1255 = vmatpush1.msra.mxu0 0.0
  %1256 = vmatprep.subr.mxu0 0.0
  %1257 = vmatpush1.msra.mxu0 0.0
  %1258 = vmatprep.subr.mxu0 0.0
  %1259 = vmatpush1.msra.mxu0 0.0
  %1260 = vmatprep.subr.mxu0 0.0
  %1261 = vmatpush1.msra.mxu0 0.0
  %1262 = vmatprep.subr.mxu0 0.0
  %1263 = vmatpush1.msra.mxu0 0.0
  %1264 = vmatprep.subr.mxu0 0.0
  %1265 = vmatpush1.msra.mxu0 0.0
  %1266 = vmatprep.subr.mxu0 0.0
  %1267 = vmatpush1.msra.mxu0 0.0
  %1268 = vmatprep.subr.mxu0 0.0
  %1269 = vmatpush1.msra.mxu0 0.0
  %1270 = vmatprep.subr.mxu0 0.0
  %1271 = vmatpush1.msra.mxu0 0.0
  %1272 = vmatprep.subr.mxu0 0.0
  %1273 = vmatpush1.msra.mxu0 0.0
  %1274 = vmatprep.subr.mxu0 0.0
  %1275 = vmatpush1.msra.mxu0 0.0
  %1276 = vmatprep.subr.mxu0 0.0
  %1277 = vmatpush1.msra.mxu0 0.0
  %1278 = vmatprep.subr.mxu0 0.0
  %1279 = vmatpush1.msra.mxu0 0.0
  %1280 = vmatprep.subr.mxu0 0.0
  %1281 = vmatpush1.msra.mxu0 0.0
  %1282 = vmatprep.subr.mxu0 0.0
  %1283 = vmatpush1.msra.mxu0 0.0
  %1284 = vmatprep.subr.mxu0 0.0
  %1285 = vmatpush1.msra.mxu0 0.0
  %1286 = vmatprep.subr.mxu0 0.0
  %1287 = vmatpush1.msra.mxu0 0.0
  %1288 = vmatprep.subr.mxu0 0.0
  %1289 = vmatpush1.msra.mxu0 0.0
  %1290 = vmatprep.subr.mxu0 0.0
  %1291 = vmatpush1.msra.mxu0 0.0
  %1292 = vmatprep.subr.mxu0 0.0
  %1293 = vmatpush1.msra.mxu0 0.0
  %1294 = vmatprep.subr.mxu0 0.0
  %1295 = vmatpush1.msra.mxu0 0.0
  %1296 = vmatprep.subr.mxu0 0.0
  %1297 = vmatpush1.msra.mxu0 0.0
  %1298 = vmatprep.subr.mxu0 0.0
  %1299 = vmatpush1.msra.mxu0 0.0
  %1300 = vmatprep.mubr.f32.mxu0 0.0
  %1301 = vmatmul.mubr.f32.gmra.mrb[0].mxu0 %v1234
  %v1302 = vpop.f32.mrb[0].mxu0
  %v1303 = vadd.f32 0.0, %v1302
  %v1304 = vpop.f32.mrb[0].mxu0
  %1305 = vdwg.mxu0
  %v1306 = vadd.f32 %v1233, %v1303
  %v1307 = vxor.u32 %v1306, 2147483648
  %v1308 = vmul.f32 %v1307, 1.442695
  %v1309 = vpow.pop %v1308
  %v1310 = vadd.f32 %v1309, 1.0
  %v1311 = vrcp.pop %v1310
  %v1312 = vmul.f32 1.0, %v1311
  %v1313 = vtanh.pop %v1306
  %v1314 = vmul.f32 %v1312, %v1119
  %1316 = vrot.lane.b32.xlu0 %v1313, 64
  %v1317 = vpop.permute.xlu0 %1316
  %v1319 = vmul.f32 %v1312, %v1317
  %1321 = vrot.lane.b32.xlu0 %v1319, 32
  %v1322 = vpop.permute.xlu0 %1321
  %v1324 = vadd.f32 %v1314, %v1322
  %v1325 = vtanh.pop %v1324
  %1327 = vrot.lane.b32.xlu0 %v1325, 64
  %v1328 = vpop.permute.xlu0 %1327
  %v1330 = vmul.f32 %v1312, %v1328
  %1332 = vrot.lane.b32.xlu0 %v1330, 32
  %v1333 = vpop.permute.xlu0 %1332
  %1336 = vrot.lane.b32.xlu0 %v1231, 64
  %v1337 = vpop.permute.xlu0 %1336
  %v1339 = vsel %vm204, %v1333, %v1337
  %v1341 = vsel %vm314, %v1339, 0
  %1343 = vmatprep.subr.mxu0 0.0
  %1344 = vmatpush1.msra.mxu0 %v194
  %1345 = vmatprep.subr.mxu0 0.0
  %1346 = vmatpush1.msra.mxu0 %v195
  %1347 = vmatprep.subr.mxu0 0.0
  %1348 = vmatpush1.msra.mxu0 %v196
  %1349 = vmatprep.subr.mxu0 0.0
  %1350 = vmatpush1.msra.mxu0 %v197
  %1351 = vmatprep.subr.mxu0 0.0
  %1352 = vmatpush1.msra.mxu0 %v198
  %1353 = vmatprep.subr.mxu0 0.0
  %1354 = vmatpush1.msra.mxu0 %v199
  %1355 = vmatprep.subr.mxu0 0.0
  %1356 = vmatpush1.msra.mxu0 %v200
  %1357 = vmatprep.subr.mxu0 0.0
  %1358 = vmatpush1.msra.mxu0 %v201
  %1359 = vmatprep.subr.mxu0 0.0
  %1360 = vmatpush1.msra.mxu0 0.0
  %1361 = vmatprep.subr.mxu0 0.0
  %1362 = vmatpush1.msra.mxu0 0.0
  %1363 = vmatprep.subr.mxu0 0.0
  %1364 = vmatpush1.msra.mxu0 0.0
  %1365 = vmatprep.subr.mxu0 0.0
  %1366 = vmatpush1.msra.mxu0 0.0
  %1367 = vmatprep.subr.mxu0 0.0
  %1368 = vmatpush1.msra.mxu0 0.0
  %1369 = vmatprep.subr.mxu0 0.0
  %1370 = vmatpush1.msra.mxu0 0.0
  %1371 = vmatprep.subr.mxu0 0.0
  %1372 = vmatpush1.msra.mxu0 0.0
  %1373 = vmatprep.subr.mxu0 0.0
  %1374 = vmatpush1.msra.mxu0 0.0
  %1375 = vmatprep.subr.mxu0 0.0
  %1376 = vmatpush1.msra.mxu0 0.0
  %1377 = vmatprep.subr.mxu0 0.0
  %1378 = vmatpush1.msra.mxu0 0.0
  %1379 = vmatprep.subr.mxu0 0.0
  %1380 = vmatpush1.msra.mxu0 0.0
  %1381 = vmatprep.subr.mxu0 0.0
  %1382 = vmatpush1.msra.mxu0 0.0
  %1383 = vmatprep.subr.mxu0 0.0
  %1384 = vmatpush1.msra.mxu0 0.0
  %1385 = vmatprep.subr.mxu0 0.0
  %1386 = vmatpush1.msra.mxu0 0.0
  %1387 = vmatprep.subr.mxu0 0.0
  %1388 = vmatpush1.msra.mxu0 0.0
  %1389 = vmatprep.subr.mxu0 0.0
  %1390 = vmatpush1.msra.mxu0 0.0
  %1391 = vmatprep.subr.mxu0 0.0
  %1392 = vmatpush1.msra.mxu0 0.0
  %1393 = vmatprep.subr.mxu0 0.0
  %1394 = vmatpush1.msra.mxu0 0.0
  %1395 = vmatprep.subr.mxu0 0.0
  %1396 = vmatpush1.msra.mxu0 0.0
  %1397 = vmatprep.subr.mxu0 0.0
  %1398 = vmatpush1.msra.mxu0 0.0
  %1399 = vmatprep.subr.mxu0 0.0
  %1400 = vmatpush1.msra.mxu0 0.0
  %1401 = vmatprep.subr.mxu0 0.0
  %1402 = vmatpush1.msra.mxu0 0.0
  %1403 = vmatprep.subr.mxu0 0.0
  %1404 = vmatpush1.msra.mxu0 0.0
  %1405 = vmatprep.subr.mxu0 0.0
  %1406 = vmatpush1.msra.mxu0 0.0
  %1407 = vmatprep.mubr.f32.mxu0 0.0
  %1408 = vmatmul.mubr.f32.gmra.mrb[0].mxu0 %v1341
  %v1409 = vpop.f32.mrb[0].mxu0
  %v1410 = vadd.f32 %v312, %v1409
  %v1411 = vpop.f32.mrb[0].mxu0
  %1412 = vdwg.mxu0
  %v1413 = vxor.u32 %v1410, 2147483648
  %v1414 = vmul.f32 %v1413, 1.442695
  %v1415 = vpow.pop %v1414
  %v1416 = vadd.f32 %v1415, 1.0
  %v1417 = vrcp.pop %v1416
  %v1418 = vmul.f32 1.0, %v1417
  %v1419 = vtanh.pop %v1410
  %v1420 = vmul.f32 %v1418, %v1225
  %1422 = vrot.lane.b32.xlu0 %v1419, 64
  %v1423 = vpop.permute.xlu0 %1422
  %v1425 = vmul.f32 %v1418, %v1423
  %1427 = vrot.lane.b32.xlu0 %v1425, 32
  %v1428 = vpop.permute.xlu0 %1427
  %v1430 = vadd.f32 %v1420, %v1428
  %v1431 = vtanh.pop %v1430
  %1433 = vrot.lane.b32.xlu0 %v1431, 64
  %v1434 = vpop.permute.xlu0 %1433
  %v1436 = vmul.f32 %v1418, %v1434
  %s1437 = scalar_lea.vmem [#allocation2], 48
  %v1438 = vld [vmem:[%s1437] sm:$0xff]
  %v1439 = vsel %vm204, %v1333, 0
  %1441 = vmatprep.subr.mxu0 0.0
  %1442 = vmatpush1.msra.mxu0 %v190
  %1443 = vmatprep.subr.mxu0 0.0
  %1444 = vmatpush1.msra.mxu0 %v191
  %1445 = vmatprep.subr.mxu0 0.0
  %1446 = vmatpush1.msra.mxu0 %v192
  %1447 = vmatprep.subr.mxu0 0.0
  %1448 = vmatpush1.msra.mxu0 %v193
  %1449 = vmatprep.subr.mxu0 0.0
  %1450 = vmatpush1.msra.mxu0 0.0
  %1451 = vmatprep.subr.mxu0 0.0
  %1452 = vmatpush1.msra.mxu0 0.0
  %1453 = vmatprep.subr.mxu0 0.0
  %1454 = vmatpush1.msra.mxu0 0.0
  %1455 = vmatprep.subr.mxu0 0.0
  %1456 = vmatpush1.msra.mxu0 0.0
  %1457 = vmatprep.subr.mxu0 0.0
  %1458 = vmatpush1.msra.mxu0 0.0
  %1459 = vmatprep.subr.mxu0 0.0
  %1460 = vmatpush1.msra.mxu0 0.0
  %1461 = vmatprep.subr.mxu0 0.0
  %1462 = vmatpush1.msra.mxu0 0.0
  %1463 = vmatprep.subr.mxu0 0.0
  %1464 = vmatpush1.msra.mxu0 0.0
  %1465 = vmatprep.subr.mxu0 0.0
  %1466 = vmatpush1.msra.mxu0 0.0
  %1467 = vmatprep.subr.mxu0 0.0
  %1468 = vmatpush1.msra.mxu0 0.0
  %1469 = vmatprep.subr.mxu0 0.0
  %1470 = vmatpush1.msra.mxu0 0.0
  %1471 = vmatprep.subr.mxu0 0.0
  %1472 = vmatpush1.msra.mxu0 0.0
  %1473 = vmatprep.subr.mxu0 0.0
  %1474 = vmatpush1.msra.mxu0 0.0
  %1475 = vmatprep.subr.mxu0 0.0
  %1476 = vmatpush1.msra.mxu0 0.0
  %1477 = vmatprep.subr.mxu0 0.0
  %1478 = vmatpush1.msra.mxu0 0.0
  %1479 = vmatprep.subr.mxu0 0.0
  %1480 = vmatpush1.msra.mxu0 0.0
  %1481 = vmatprep.subr.mxu0 0.0
  %1482 = vmatpush1.msra.mxu0 0.0
  %1483 = vmatprep.subr.mxu0 0.0
  %1484 = vmatpush1.msra.mxu0 0.0
  %1485 = vmatprep.subr.mxu0 0.0
  %1486 = vmatpush1.msra.mxu0 0.0
  %1487 = vmatprep.subr.mxu0 0.0
  %1488 = vmatpush1.msra.mxu0 0.0
  %1489 = vmatprep.subr.mxu0 0.0
  %1490 = vmatpush1.msra.mxu0 0.0
  %1491 = vmatprep.subr.mxu0 0.0
  %1492 = vmatpush1.msra.mxu0 0.0
  %1493 = vmatprep.subr.mxu0 0.0
  %1494 = vmatpush1.msra.mxu0 0.0
  %1495 = vmatprep.subr.mxu0 0.0
  %1496 = vmatpush1.msra.mxu0 0.0
  %1497 = vmatprep.subr.mxu0 0.0
  %1498 = vmatpush1.msra.mxu0 0.0
  %1499 = vmatprep.subr.mxu0 0.0
  %1500 = vmatpush1.msra.mxu0 0.0
  %1501 = vmatprep.subr.mxu0 0.0
  %1502 = vmatpush1.msra.mxu0 0.0
  %1503 = vmatprep.subr.mxu0 0.0
  %1504 = vmatpush1.msra.mxu0 0.0
  %1505 = vmatprep.mubr.f32.mxu0 0.0
  %1506 = vmatmul.mubr.f32.gmra.mrb[0].mxu0 %v1439
  %v1507 = vpop.f32.mrb[0].mxu0
  %v1508 = vadd.f32 0.0, %v1507
  %v1509 = vpop.f32.mrb[0].mxu0
  %1510 = vdwg.mxu0
  %v1511 = vadd.f32 %v1438, %v1508
  %v1512 = vxor.u32 %v1511, 2147483648
  %v1513 = vmul.f32 %v1512, 1.442695
  %v1514 = vpow.pop %v1513
  %v1515 = vadd.f32 %v1514, 1.0
  %v1516 = vrcp.pop %v1515
  %v1517 = vmul.f32 1.0, %v1516
  %v1518 = vtanh.pop %v1511
  %v1519 = vmul.f32 %v1517, %v1324
  %1521 = vrot.lane.b32.xlu0 %v1518, 64
  %v1522 = vpop.permute.xlu0 %1521
  %v1524 = vmul.f32 %v1517, %v1522
  %1526 = vrot.lane.b32.xlu0 %v1524, 32
  %v1527 = vpop.permute.xlu0 %1526
  %v1529 = vadd.f32 %v1519, %v1527
  %v1530 = vtanh.pop %v1529
  %1532 = vrot.lane.b32.xlu0 %v1530, 64
  %v1533 = vpop.permute.xlu0 %1532
  %v1535 = vmul.f32 %v1517, %v1533
  %1537 = vrot.lane.b32.xlu0 %v1535, 32
  %v1538 = vpop.permute.xlu0 %1537
  %1541 = vrot.lane.b32.xlu0 %v1436, 64
  %v1542 = vpop.permute.xlu0 %1541
  %v1544 = vsel %vm204, %v1538, %v1542
  %v1546 = vsel %vm314, %v1544, 0
  %1548 = vmatprep.subr.mxu0 0.0
  %1549 = vmatpush1.msra.mxu0 %v194
  %1550 = vmatprep.subr.mxu0 0.0
  %1551 = vmatpush1.msra.mxu0 %v195
  %1552 = vmatprep.subr.mxu0 0.0
  %1553 = vmatpush1.msra.mxu0 %v196
  %1554 = vmatprep.subr.mxu0 0.0
  %1555 = vmatpush1.msra.mxu0 %v197
  %1556 = vmatprep.subr.mxu0 0.0
  %1557 = vmatpush1.msra.mxu0 %v198
  %1558 = vmatprep.subr.mxu0 0.0
  %1559 = vmatpush1.msra.mxu0 %v199
  %1560 = vmatprep.subr.mxu0 0.0
  %1561 = vmatpush1.msra.mxu0 %v200
  %1562 = vmatprep.subr.mxu0 0.0
  %1563 = vmatpush1.msra.mxu0 %v201
  %1564 = vmatprep.subr.mxu0 0.0
  %1565 = vmatpush1.msra.mxu0 0.0
  %1566 = vmatprep.subr.mxu0 0.0
  %1567 = vmatpush1.msra.mxu0 0.0
  %1568 = vmatprep.subr.mxu0 0.0
  %1569 = vmatpush1.msra.mxu0 0.0
  %1570 = vmatprep.subr.mxu0 0.0
  %1571 = vmatpush1.msra.mxu0 0.0
  %1572 = vmatprep.subr.mxu0 0.0
  %1573 = vmatpush1.msra.mxu0 0.0
  %1574 = vmatprep.subr.mxu0 0.0
  %1575 = vmatpush1.msra.mxu0 0.0
  %1576 = vmatprep.subr.mxu0 0.0
  %1577 = vmatpush1.msra.mxu0 0.0
  %1578 = vmatprep.subr.mxu0 0.0
  %1579 = vmatpush1.msra.mxu0 0.0
  %1580 = vmatprep.subr.mxu0 0.0
  %1581 = vmatpush1.msra.mxu0 0.0
  %1582 = vmatprep.subr.mxu0 0.0
  %1583 = vmatpush1.msra.mxu0 0.0
  %1584 = vmatprep.subr.mxu0 0.0
  %1585 = vmatpush1.msra.mxu0 0.0
  %1586 = vmatprep.subr.mxu0 0.0
  %1587 = vmatpush1.msra.mxu0 0.0
  %1588 = vmatprep.subr.mxu0 0.0
  %1589 = vmatpush1.msra.mxu0 0.0
  %1590 = vmatprep.subr.mxu0 0.0
  %1591 = vmatpush1.msra.mxu0 0.0
  %1592 = vmatprep.subr.mxu0 0.0
  %1593 = vmatpush1.msra.mxu0 0.0
  %1594 = vmatprep.subr.mxu0 0.0
  %1595 = vmatpush1.msra.mxu0 0.0
  %1596 = vmatprep.subr.mxu0 0.0
  %1597 = vmatpush1.msra.mxu0 0.0
  %1598 = vmatprep.subr.mxu0 0.0
  %1599 = vmatpush1.msra.mxu0 0.0
  %1600 = vmatprep.subr.mxu0 0.0
  %1601 = vmatpush1.msra.mxu0 0.0
  %1602 = vmatprep.subr.mxu0 0.0
  %1603 = vmatpush1.msra.mxu0 0.0
  %1604 = vmatprep.subr.mxu0 0.0
  %1605 = vmatpush1.msra.mxu0 0.0
  %1606 = vmatprep.subr.mxu0 0.0
  %1607 = vmatpush1.msra.mxu0 0.0
  %1608 = vmatprep.subr.mxu0 0.0
  %1609 = vmatpush1.msra.mxu0 0.0
  %1610 = vmatprep.subr.mxu0 0.0
  %1611 = vmatpush1.msra.mxu0 0.0
  %1612 = vmatprep.mubr.f32.mxu0 0.0
  %1613 = vmatmul.mubr.f32.gmra.mrb[0].mxu0 %v1546
  %v1614 = vpop.f32.mrb[0].mxu0
  %v1615 = vadd.f32 %v312, %v1614
  %v1616 = vpop.f32.mrb[0].mxu0
  %1617 = vdwg.mxu0
  %v1618 = vxor.u32 %v1615, 2147483648
  %v1619 = vmul.f32 %v1618, 1.442695
  %v1620 = vpow.pop %v1619
  %v1621 = vadd.f32 %v1620, 1.0
  %v1622 = vrcp.pop %v1621
  %v1623 = vmul.f32 1.0, %v1622
  %v1624 = vtanh.pop %v1615
  %v1625 = vmul.f32 %v1623, %v1430
  %1627 = vrot.lane.b32.xlu0 %v1624, 64
  %v1628 = vpop.permute.xlu0 %1627
  %v1630 = vmul.f32 %v1623, %v1628
  %1632 = vrot.lane.b32.xlu0 %v1630, 32
  %v1633 = vpop.permute.xlu0 %1632
  %v1635 = vadd.f32 %v1625, %v1633
  %v1636 = vtanh.pop %v1635
  %1638 = vrot.lane.b32.xlu0 %v1636, 64
  %v1639 = vpop.permute.xlu0 %1638
  %v1641 = vmul.f32 %v1623, %v1639
  %s1642 = scalar_lea.vmem [#allocation2], 56
  %v1643 = vld [vmem:[%s1642] sm:$0xff]
  %v1644 = vsel %vm204, %v1538, 0
  %1646 = vmatprep.subr.mxu0 0.0
  %1647 = vmatpush1.msra.mxu0 %v190
  %1648 = vmatprep.subr.mxu0 0.0
  %1649 = vmatpush1.msra.mxu0 %v191
  %1650 = vmatprep.subr.mxu0 0.0
  %1651 = vmatpush1.msra.mxu0 %v192
  %1652 = vmatprep.subr.mxu0 0.0
  %1653 = vmatpush1.msra.mxu0 %v193
  %1654 = vmatprep.subr.mxu0 0.0
  %1655 = vmatpush1.msra.mxu0 0.0
  %1656 = vmatprep.subr.mxu0 0.0
  %1657 = vmatpush1.msra.mxu0 0.0
  %1658 = vmatprep.subr.mxu0 0.0
  %1659 = vmatpush1.msra.mxu0 0.0
  %1660 = vmatprep.subr.mxu0 0.0
  %1661 = vmatpush1.msra.mxu0 0.0
  %1662 = vmatprep.subr.mxu0 0.0
  %1663 = vmatpush1.msra.mxu0 0.0
  %1664 = vmatprep.subr.mxu0 0.0
  %1665 = vmatpush1.msra.mxu0 0.0
  %1666 = vmatprep.subr.mxu0 0.0
  %1667 = vmatpush1.msra.mxu0 0.0
  %1668 = vmatprep.subr.mxu0 0.0
  %1669 = vmatpush1.msra.mxu0 0.0
  %1670 = vmatprep.subr.mxu0 0.0
  %1671 = vmatpush1.msra.mxu0 0.0
  %1672 = vmatprep.subr.mxu0 0.0
  %1673 = vmatpush1.msra.mxu0 0.0
  %1674 = vmatprep.subr.mxu0 0.0
  %1675 = vmatpush1.msra.mxu0 0.0
  %1676 = vmatprep.subr.mxu0 0.0
  %1677 = vmatpush1.msra.mxu0 0.0
  %1678 = vmatprep.subr.mxu0 0.0
  %1679 = vmatpush1.msra.mxu0 0.0
  %1680 = vmatprep.subr.mxu0 0.0
  %1681 = vmatpush1.msra.mxu0 0.0
  %1682 = vmatprep.subr.mxu0 0.0
  %1683 = vmatpush1.msra.mxu0 0.0
  %1684 = vmatprep.subr.mxu0 0.0
  %1685 = vmatpush1.msra.mxu0 0.0
  %1686 = vmatprep.subr.mxu0 0.0
  %1687 = vmatpush1.msra.mxu0 0.0
  %1688 = vmatprep.subr.mxu0 0.0
  %1689 = vmatpush1.msra.mxu0 0.0
  %1690 = vmatprep.subr.mxu0 0.0
  %1691 = vmatpush1.msra.mxu0 0.0
  %1692 = vmatprep.subr.mxu0 0.0
  %1693 = vmatpush1.msra.mxu0 0.0
  %1694 = vmatprep.subr.mxu0 0.0
  %1695 = vmatpush1.msra.mxu0 0.0
  %1696 = vmatprep.subr.mxu0 0.0
  %1697 = vmatpush1.msra.mxu0 0.0
  %1698 = vmatprep.subr.mxu0 0.0
  %1699 = vmatpush1.msra.mxu0 0.0
  %1700 = vmatprep.subr.mxu0 0.0
  %1701 = vmatpush1.msra.mxu0 0.0
  %1702 = vmatprep.subr.mxu0 0.0
  %1703 = vmatpush1.msra.mxu0 0.0
  %1704 = vmatprep.subr.mxu0 0.0
  %1705 = vmatpush1.msra.mxu0 0.0
  %1706 = vmatprep.subr.mxu0 0.0
  %1707 = vmatpush1.msra.mxu0 0.0
  %1708 = vmatprep.subr.mxu0 0.0
  %1709 = vmatpush1.msra.mxu0 0.0
  %1710 = vmatprep.mubr.f32.mxu0 0.0
  %1711 = vmatmul.mubr.f32.gmra.mrb[0].mxu0 %v1644
  %v1712 = vpop.f32.mrb[0].mxu0
  %v1713 = vadd.f32 0.0, %v1712
  %v1714 = vpop.f32.mrb[0].mxu0
  %1715 = vdwg.mxu0
  %v1716 = vadd.f32 %v1643, %v1713
  %v1717 = vxor.u32 %v1716, 2147483648
  %v1718 = vmul.f32 %v1717, 1.442695
  %v1719 = vpow.pop %v1718
  %v1720 = vadd.f32 %v1719, 1.0
  %v1721 = vrcp.pop %v1720
  %v1722 = vmul.f32 1.0, %v1721
  %v1723 = vtanh.pop %v1716
  %v1724 = vmul.f32 %v1722, %v1529
  %1726 = vrot.lane.b32.xlu0 %v1723, 64
  %v1727 = vpop.permute.xlu0 %1726
  %v1729 = vmul.f32 %v1722, %v1727
  %1731 = vrot.lane.b32.xlu0 %v1729, 32
  %v1732 = vpop.permute.xlu0 %1731
  %v1734 = vadd.f32 %v1724, %v1732
  %v1735 = vtanh.pop %v1734
  %1737 = vrot.lane.b32.xlu0 %v1735, 64
  %v1738 = vpop.permute.xlu0 %1737
  %v1740 = vmul.f32 %v1722, %v1738
  %1742 = vrot.lane.b32.xlu0 %v1740, 32
  %v1743 = vpop.permute.xlu0 %1742
  %1746 = vrot.lane.b32.xlu0 %v1641, 64
  %v1747 = vpop.permute.xlu0 %1746
  %v1749 = vsel %vm204, %v1743, %v1747
  %v1751 = vsel %vm314, %v1749, 0
  %1753 = vmatprep.subr.mxu0 0.0
  %1754 = vmatpush1.msra.mxu0 %v194
  %1755 = vmatprep.subr.mxu0 0.0
  %1756 = vmatpush1.msra.mxu0 %v195
  %1757 = vmatprep.subr.mxu0 0.0
  %1758 = vmatpush1.msra.mxu0 %v196
  %1759 = vmatprep.subr.mxu0 0.0
  %1760 = vmatpush1.msra.mxu0 %v197
  %1761 = vmatprep.subr.mxu0 0.0
  %1762 = vmatpush1.msra.mxu0 %v198
  %1763 = vmatprep.subr.mxu0 0.0
  %1764 = vmatpush1.msra.mxu0 %v199
  %1765 = vmatprep.subr.mxu0 0.0
  %1766 = vmatpush1.msra.mxu0 %v200
  %1767 = vmatprep.subr.mxu0 0.0
  %1768 = vmatpush1.msra.mxu0 %v201
  %1769 = vmatprep.subr.mxu0 0.0
  %1770 = vmatpush1.msra.mxu0 0.0
  %1771 = vmatprep.subr.mxu0 0.0
  %1772 = vmatpush1.msra.mxu0 0.0
  %1773 = vmatprep.subr.mxu0 0.0
  %1774 = vmatpush1.msra.mxu0 0.0
  %1775 = vmatprep.subr.mxu0 0.0
  %1776 = vmatpush1.msra.mxu0 0.0
  %1777 = vmatprep.subr.mxu0 0.0
  %1778 = vmatpush1.msra.mxu0 0.0
  %1779 = vmatprep.subr.mxu0 0.0
  %1780 = vmatpush1.msra.mxu0 0.0
  %1781 = vmatprep.subr.mxu0 0.0
  %1782 = vmatpush1.msra.mxu0 0.0
  %1783 = vmatprep.subr.mxu0 0.0
  %1784 = vmatpush1.msra.mxu0 0.0
  %1785 = vmatprep.subr.mxu0 0.0
  %1786 = vmatpush1.msra.mxu0 0.0
  %1787 = vmatprep.subr.mxu0 0.0
  %1788 = vmatpush1.msra.mxu0 0.0
  %1789 = vmatprep.subr.mxu0 0.0
  %1790 = vmatpush1.msra.mxu0 0.0
  %1791 = vmatprep.subr.mxu0 0.0
  %1792 = vmatpush1.msra.mxu0 0.0
  %1793 = vmatprep.subr.mxu0 0.0
  %1794 = vmatpush1.msra.mxu0 0.0
  %1795 = vmatprep.subr.mxu0 0.0
  %1796 = vmatpush1.msra.mxu0 0.0
  %1797 = vmatprep.subr.mxu0 0.0
  %1798 = vmatpush1.msra.mxu0 0.0
  %1799 = vmatprep.subr.mxu0 0.0
  %1800 = vmatpush1.msra.mxu0 0.0
  %1801 = vmatprep.subr.mxu0 0.0
  %1802 = vmatpush1.msra.mxu0 0.0
  %1803 = vmatprep.subr.mxu0 0.0
  %1804 = vmatpush1.msra.mxu0 0.0
  %1805 = vmatprep.subr.mxu0 0.0
  %1806 = vmatpush1.msra.mxu0 0.0
  %1807 = vmatprep.subr.mxu0 0.0
  %1808 = vmatpush1.msra.mxu0 0.0
  %1809 = vmatprep.subr.mxu0 0.0
  %1810 = vmatpush1.msra.mxu0 0.0
  %1811 = vmatprep.subr.mxu0 0.0
  %1812 = vmatpush1.msra.mxu0 0.0
  %1813 = vmatprep.subr.mxu0 0.0
  %1814 = vmatpush1.msra.mxu0 0.0
  %1815 = vmatprep.subr.mxu0 0.0
  %1816 = vmatpush1.msra.mxu0 0.0
  %1817 = vmatprep.mubr.f32.mxu0 0.0
  %1818 = vmatmul.mubr.f32.gmra.mrb[0].mxu0 %v1751
  %v1819 = vpop.f32.mrb[0].mxu0
  %v1820 = vadd.f32 %v312, %v1819
  %v1821 = vpop.f32.mrb[0].mxu0
  %1822 = vdwg.mxu0
  %v1823 = vxor.u32 %v1820, 2147483648
  %v1824 = vmul.f32 %v1823, 1.442695
  %v1825 = vpow.pop %v1824
  %v1826 = vadd.f32 %v1825, 1.0
  %v1827 = vrcp.pop %v1826
  %v1828 = vmul.f32 1.0, %v1827
  %v1829 = vtanh.pop %v1820
  %v1830 = vmul.f32 %v1828, %v1635
  %1832 = vrot.lane.b32.xlu0 %v1829, 64
  %v1833 = vpop.permute.xlu0 %1832
  %v1835 = vmul.f32 %v1828, %v1833
  %1837 = vrot.lane.b32.xlu0 %v1835, 32
  %v1838 = vpop.permute.xlu0 %1837
  %v1840 = vadd.f32 %v1830, %v1838
  %v1841 = vtanh.pop %v1840
  %1843 = vrot.lane.b32.xlu0 %v1841, 64
  %v1844 = vpop.permute.xlu0 %1843
  %v1846 = vmul.f32 %v1828, %v1844
  %v1847 = vld [vmem:[%s6] sm:$0xff]
  %v1848 = vld [vmem:[%s6 + $0x8] sm:$0xff]
  %v1849 = vld [vmem:[%s6 + $0x10] sm:$0xff]
  %v1850 = vld [vmem:[%s6 + $0x18] sm:$0xff]
  %v1851 = vld [vmem:[%s7] sm:$0x1]
  %v1853 = vlaneseq
  %v1854 = vshrl.u32 %v1853, 7
  %v1855 = vsub.s32 0, %v1854
  %v1856 = vrot.slane %v1851, %v1855
  %1859 = vrot.lane.b32.xlu0 %v1846, 32
  %v1860 = vpop.permute.xlu0 %1859
  %v1861 = vsel %vm204, %v1860, 0
  %1863 = vmatprep.subr.mxu0 0.0
  %1864 = vmatpush1.msra.mxu0 %v1847
  %1865 = vmatprep.subr.mxu0 0.0
  %1866 = vmatpush1.msra.mxu0 %v1848
  %1867 = vmatprep.subr.mxu0 0.0
  %1868 = vmatpush1.msra.mxu0 %v1849
  %1869 = vmatprep.subr.mxu0 0.0
  %1870 = vmatpush1.msra.mxu0 %v1850
  %1871 = vmatprep.subr.mxu0 0.0
  %1872 = vmatpush1.msra.mxu0 0.0
  %1873 = vmatprep.subr.mxu0 0.0
  %1874 = vmatpush1.msra.mxu0 0.0
  %1875 = vmatprep.subr.mxu0 0.0
  %1876 = vmatpush1.msra.mxu0 0.0
  %1877 = vmatprep.subr.mxu0 0.0
  %1878 = vmatpush1.msra.mxu0 0.0
  %1879 = vmatprep.subr.mxu0 0.0
  %1880 = vmatpush1.msra.mxu0 0.0
  %1881 = vmatprep.subr.mxu0 0.0
  %1882 = vmatpush1.msra.mxu0 0.0
  %1883 = vmatprep.subr.mxu0 0.0
  %1884 = vmatpush1.msra.mxu0 0.0
  %1885 = vmatprep.subr.mxu0 0.0
  %1886 = vmatpush1.msra.mxu0 0.0
  %1887 = vmatprep.subr.mxu0 0.0
  %1888 = vmatpush1.msra.mxu0 0.0
  %1889 = vmatprep.subr.mxu0 0.0
  %1890 = vmatpush1.msra.mxu0 0.0
  %1891 = vmatprep.subr.mxu0 0.0
  %1892 = vmatpush1.msra.mxu0 0.0
  %1893 = vmatprep.subr.mxu0 0.0
  %1894 = vmatpush1.msra.mxu0 0.0
  %1895 = vmatprep.subr.mxu0 0.0
  %1896 = vmatpush1.msra.mxu0 0.0
  %1897 = vmatprep.subr.mxu0 0.0
  %1898 = vmatpush1.msra.mxu0 0.0
  %1899 = vmatprep.subr.mxu0 0.0
  %1900 = vmatpush1.msra.mxu0 0.0
  %1901 = vmatprep.subr.mxu0 0.0
  %1902 = vmatpush1.msra.mxu0 0.0
  %1903 = vmatprep.subr.mxu0 0.0
  %1904 = vmatpush1.msra.mxu0 0.0
  %1905 = vmatprep.subr.mxu0 0.0
  %1906 = vmatpush1.msra.mxu0 0.0
  %1907 = vmatprep.subr.mxu0 0.0
  %1908 = vmatpush1.msra.mxu0 0.0
  %1909 = vmatprep.subr.mxu0 0.0
  %1910 = vmatpush1.msra.mxu0 0.0
  %1911 = vmatprep.subr.mxu0 0.0
  %1912 = vmatpush1.msra.mxu0 0.0
  %1913 = vmatprep.subr.mxu0 0.0
  %1914 = vmatpush1.msra.mxu0 0.0
  %1915 = vmatprep.subr.mxu0 0.0
  %1916 = vmatpush1.msra.mxu0 0.0
  %1917 = vmatprep.subr.mxu0 0.0
  %1918 = vmatpush1.msra.mxu0 0.0
  %1919 = vmatprep.subr.mxu0 0.0
  %1920 = vmatpush1.msra.mxu0 0.0
  %1921 = vmatprep.subr.mxu0 0.0
  %1922 = vmatpush1.msra.mxu0 0.0
  %1923 = vmatprep.subr.mxu0 0.0
  %1924 = vmatpush1.msra.mxu0 0.0
  %1925 = vmatprep.subr.mxu0 0.0
  %1926 = vmatpush1.msra.mxu0 0.0
  %1927 = vmatprep.mubr.f32.mxu0 0.0
  %1928 = vmatmul.mubr.f32.gmra.mrb[0].mxu0 %v1861
  %v1929 = vpop.f32.mrb[0].mxu0
  %v1930 = vadd.f32 %v1856, %v1929
  %v1931 = vpop.f32.mrb[0].mxu0
  %1932 = vdwg.mxu0
  %v1933 = vmax.f32 %v1930, 0.0
  %v1934 = vld [vmem:[%s8] sm:$0xff]
  %v1935 = vld [vmem:[%s8 + $0x8] sm:$0xff]
  %v1936 = vld [vmem:[%s8 + $0x10] sm:$0xff]
  %v1937 = vld [vmem:[%s8 + $0x18] sm:$0xff]
  %v1938 = vld [vmem:[%s8 + $0x20] sm:$0xff]
  %v1939 = vld [vmem:[%s8 + $0x28] sm:$0xff]
  %v1940 = vld [vmem:[%s8 + $0x30] sm:$0xff]
  %v1941 = vld [vmem:[%s8 + $0x38] sm:$0xff]
  %v1942 = vld [vmem:[%s9] sm:$0x1]
  %v1944 = vlaneseq
  %v1945 = vshrl.u32 %v1944, 7
  %v1946 = vsub.s32 0, %v1945
  %v1947 = vrot.slane %v1942, %v1946
  %v1950 = vsel %vm314, %v1933, 0
  %1952 = vmatprep.subr.mxu0 0.0
  %1953 = vmatpush1.msra.mxu0 %v1934
  %1954 = vmatprep.subr.mxu0 0.0
  %1955 = vmatpush1.msra.mxu0 %v1935
  %1956 = vmatprep.subr.mxu0 0.0
  %1957 = vmatpush1.msra.mxu0 %v1936
  %1958 = vmatprep.subr.mxu0 0.0
  %1959 = vmatpush1.msra.mxu0 %v1937
  %1960 = vmatprep.subr.mxu0 0.0
  %1961 = vmatpush1.msra.mxu0 %v1938
  %1962 = vmatprep.subr.mxu0 0.0
  %1963 = vmatpush1.msra.mxu0 %v1939
  %1964 = vmatprep.subr.mxu0 0.0
  %1965 = vmatpush1.msra.mxu0 %v1940
  %1966 = vmatprep.subr.mxu0 0.0
  %1967 = vmatpush1.msra.mxu0 %v1941
  %1968 = vmatprep.subr.mxu0 0.0
  %1969 = vmatpush1.msra.mxu0 0.0
  %1970 = vmatprep.subr.mxu0 0.0
  %1971 = vmatpush1.msra.mxu0 0.0
  %1972 = vmatprep.subr.mxu0 0.0
  %1973 = vmatpush1.msra.mxu0 0.0
  %1974 = vmatprep.subr.mxu0 0.0
  %1975 = vmatpush1.msra.mxu0 0.0
  %1976 = vmatprep.subr.mxu0 0.0
  %1977 = vmatpush1.msra.mxu0 0.0
  %1978 = vmatprep.subr.mxu0 0.0
  %1979 = vmatpush1.msra.mxu0 0.0
  %1980 = vmatprep.subr.mxu0 0.0
  %1981 = vmatpush1.msra.mxu0 0.0
  %1982 = vmatprep.subr.mxu0 0.0
  %1983 = vmatpush1.msra.mxu0 0.0
  %1984 = vmatprep.subr.mxu0 0.0
  %1985 = vmatpush1.msra.mxu0 0.0
  %1986 = vmatprep.subr.mxu0 0.0
  %1987 = vmatpush1.msra.mxu0 0.0
  %1988 = vmatprep.subr.mxu0 0.0
  %1989 = vmatpush1.msra.mxu0 0.0
  %1990 = vmatprep.subr.mxu0 0.0
  %1991 = vmatpush1.msra.mxu0 0.0
  %1992 = vmatprep.subr.mxu0 0.0
  %1993 = vmatpush1.msra.mxu0 0.0
  %1994 = vmatprep.subr.mxu0 0.0
  %1995 = vmatpush1.msra.mxu0 0.0
  %1996 = vmatprep.subr.mxu0 0.0
  %1997 = vmatpush1.msra.mxu0 0.0
  %1998 = vmatprep.subr.mxu0 0.0
  %1999 = vmatpush1.msra.mxu0 0.0
  %2000 = vmatprep.subr.mxu0 0.0
  %2001 = vmatpush1.msra.mxu0 0.0
  %2002 = vmatprep.subr.mxu0 0.0
  %2003 = vmatpush1.msra.mxu0 0.0
  %2004 = vmatprep.subr.mxu0 0.0
  %2005 = vmatpush1.msra.mxu0 0.0
  %2006 = vmatprep.subr.mxu0 0.0
  %2007 = vmatpush1.msra.mxu0 0.0
  %2008 = vmatprep.subr.mxu0 0.0
  %2009 = vmatpush1.msra.mxu0 0.0
  %2010 = vmatprep.subr.mxu0 0.0
  %2011 = vmatpush1.msra.mxu0 0.0
  %2012 = vmatprep.subr.mxu0 0.0
  %2013 = vmatpush1.msra.mxu0 0.0
  %2014 = vmatprep.subr.mxu0 0.0
  %2015 = vmatpush1.msra.mxu0 0.0
  %2016 = vmatprep.mubr.f32.mxu0 0.0
  %2017 = vmatmul.mubr.f32.gmra.mrb[0].mxu0 %v1950
  %v2018 = vpop.f32.mrb[0].mxu0
  %v2019 = vadd.f32 %v1947, %v2018
  %v2020 = vpop.f32.mrb[0].mxu0
  %2021 = vdwg.mxu0
  %v2022 = vlaneseq
  %v2023 = vand.u32 %v2022, 127
  %vm2024 = vcmp.lt.s32.totalorder %v2023, 10
  %v2025 = vsel %vm2024, %v2019, -inf
  %2026 = vmax.xlane.f32.xlu0 %v2025
  %v2027 = vpop.xlane.xlu0 %2026
  %v2028 = vsub.f32 %v2025, %v2027
  %v2029 = vmul.f32 %v2028, 1.442695
  %v2030 = vpow.pop %v2029
  %2031 = vadd.xlane.f32.xlu0 %v2030
  %v2032 = vpop.xlane.xlu0 %2031
  %v2033 = vrcp.pop %v2032
  %v2034 = vmul.f32 %v2030, %v2033
  %2035 = vst [vmem:[%s10] sm:$0xff] %v2034
  // Predicated region
  $region42: #{lstm_forward.1} parent=0 // pred_check
    _
  $region43: #{lstm_forward.1} parent=0 // pred_check_branch
    %2037 = sbr.rel (0) target = $region45
  $region44: #{lstm_forward.1} parent=0 // pred_region
    _
  $region45: #{lstm_forward.1} parent=0 // pred_fallthru
    _
  // Predicated region
  $region46: #{lstm_forward.1} parent=0 // pred_check
    _
  $region47: #{lstm_forward.1} parent=0 // pred_check_branch
    %2039 = sbr.rel (0) target = $region49
  $region48: #{lstm_forward.1} parent=0 // pred_region
    _
  $region49: #{lstm_forward.1} parent=0 // pred_fallthru
    _

</llo_original>
